<compile_context>
chip_gen: v7x
topology: tpu7x:2x2x1
jax: 0.10.0
libtpu: 0.0.40
codegen_flags: <defaults>
</compile_context>

<pallas_src>
import jax
import jax.numpy as jnp
from jax import lax
from jax.experimental import pallas as pl
from jax.experimental.pallas import tpu as pltpu


_RF = 5            # receptive-field growth of 5 stacked k=3 convs (per side)
_PAD_LEFT = 8      # left halo columns carried inside each window (>= _RF)
_HALO_BLOCK = 128  # extra lane-aligned halo block on the right


def _round_up(a, b):
    return ((a + b - 1) // b) * b


# ---------------------------------------------------------------------------
# Kernel factory
# ---------------------------------------------------------------------------
def _make_kernel(nf_p, gc_p, seq_len, tile_l, compute_dtype):
    W = tile_l + _HALO_BLOCK   # in-kernel window width

    # Roll wrap-around garbage and the per-layer shrinking validity region
    # must both stay inside the discarded halo columns.
    assert _PAD_LEFT >= _RF, "left halo too small for 5 stacked k=3 convs"
    assert W - _PAD_LEFT - tile_l >= _RF, "right halo too small"

    def rollacc(s, b, cp):
        # s: (3*cp, W) f32 tap partials (taps stacked along rows); b: (cp, 1).
        p0 = s[0 * cp:1 * cp, :]
        p1 = s[1 * cp:2 * cp, :]
        p2 = s[2 * cp:3 * cp, :]
        acc = b + p1                                      # center tap + bias
        acc = acc + pltpu.roll(p0, shift=1, axis=1)       # f[l-1] tap
        acc = acc + pltpu.roll(p2, shift=W - 1, axis=1)   # f[l+1] tap
        return acc                                        # (cp, W) f32

    def kernel(xa_ref, xb_ref,
               w1, b1,
               w2o, w2n, b2,
               w3o, w3n, b3,
               w4o, w4n, b4,
               w5o, w5n, b5,
               out_ref, feat):
        j = pl.program_id(1)

        # Validity mask: window column -> global sequence position.  Emulates
        # the zero padding the reference applies to x1..x4 at sequence ends.
        col = lax.broadcasted_iota(jnp.int32, (1, W), 1)
        gpos = col + (j * tile_l - _PAD_LEFT)
        vmask = jnp.logical_and(gpos >= 0, gpos < seq_len).astype(jnp.float32)

        # Residual (f32) and the resident feature slab (compute dtype).
        x_full = jnp.concatenate([xa_ref[...], xb_ref[...]], axis=1)  # f32
        x_c = x_full.astype(compute_dtype)
        feat[0:nf_p, :] = x_c

        def dot(w_ref, f):
            return jnp.dot(w_ref[...], f, preferred_element_type=jnp.float32)

        # Layer 1, plus layer 2's "old rows" dot (independent of x1, so the
        # scheduler may overlap it with the tanh below).
        s1 = dot(w1, x_c)
        a1 = rollacc(s1, b1[...], gc_p)
        s2o = dot(w2o, x_c)
        x1 = jnp.tanh(a1) * vmask
        x1c = x1.astype(compute_dtype)
        feat[nf_p:nf_p + gc_p, :] = x1c

        # Layer 2.
        s2 = s2o + dot(w2n, x1c)
        a2 = rollacc(s2, b2[...], gc_p)
        s3o = dot(w3o, feat[0:nf_p + gc_p, :])
        x2 = jnp.tanh(a2) * vmask
        x2c = x2.astype(compute_dtype)
        feat[nf_p + gc_p:nf_p + 2 * gc_p, :] = x2c

        # Layer 3.
        s3 = s3o + dot(w3n, x2c)
        a3 = rollacc(s3, b3[...], gc_p)
        s4o = dot(w4o, feat[0:nf_p + 2 * gc_p, :])
        x3 = jnp.tanh(a3) * vmask
        x3c = x3.astype(compute_dtype)
        feat[nf_p + 2 * gc_p:nf_p + 3 * gc_p, :] = x3c

        # Layer 4.
        s4 = s4o + dot(w4n, x3c)
        a4 = rollacc(s4, b4[...], gc_p)
        s5o = dot(w5o, feat[0:nf_p + 3 * gc_p, :])
        x4 = jnp.tanh(a4) * vmask
        x4c = x4.astype(compute_dtype)       # x4 never has to live in the slab

        # Layer 5 + residual epilogue (all f32; residual from f32 inputs).
        s5 = s5o + dot(w5n, x4c)
        x5 = rollacc(s5, b5[...], nf_p)
        y = x5 * 0.2 + x_full
        out_ref[...] = y[:, _PAD_LEFT:_PAD_LEFT + tile_l].astype(out_ref.dtype)

    return kernel


# ---------------------------------------------------------------------------
# Weight preparation: channel-pad, tap-stack, old/new split
# ---------------------------------------------------------------------------
def _prep_params(params, nf, gc, nf_p, gc_p, compute_dtype):
    """Feature-slab row layout is [x | x1 | x2 | x3] at padded offsets
    0, nf_p, nf_p+gc_p, nf_p+2*gc_p; weight columns follow the same padded
    layout so one dot against the slab is correct.  Taps are stacked along
    C_out (rows: [tap0 | tap1 | tap2]).  Layers >= 2 are split into the
    columns for already-resident rows ("old") and for the new x_i ("new")."""
    flat = []
    for i, (w, b) in enumerate(params):          # i = 0..4, c_in = nf + i*gc
        c_out = w.shape[0]
        c_out_p = gc_p if i < 4 else nf_p
        blocks = [jnp.pad(w[:, :nf, :],
                          ((0, c_out_p - c_out), (0, nf_p - nf), (0, 0)))]
        off = nf
        for _ in range(i):
            blocks.append(jnp.pad(w[:, off:off + gc, :],
                                  ((0, c_out_p - c_out), (0, gc_p - gc), (0, 0))))
            off += gc
        wp = jnp.concatenate(blocks, axis=1) if len(blocks) > 1 else blocks[0]
        ws = jnp.concatenate([wp[:, :, 0], wp[:, :, 1], wp[:, :, 2]],
                             axis=0).astype(compute_dtype)   # (3*c_out_p, c_in_p)
        bp = jnp.pad(b, (0, c_out_p - c_out)).astype(jnp.float32).reshape(-1, 1)
        if i == 0:
            flat.extend([ws, bp])
        else:
            c_old = nf_p + (i - 1) * gc_p
            flat.extend([ws[:, :c_old], ws[:, c_old:], bp])
    return flat


# ---------------------------------------------------------------------------
# Wrapper
# ---------------------------------------------------------------------------
def residual_dense_block_5c(x, params, *, tile_l=1024,
                            compute_dtype=jnp.bfloat16):
    """x: (N, nf, L); params: 5 x (w, b) with w in PyTorch layout (C_out, C_in, 3)."""
    N, nf, L = x.shape
    gc = params[0][0].shape[0]

    # Sublane tile (rows per (sublane, lane) tile) for the compute dtype.
    sub = (8 * 4) // jnp.dtype(compute_dtype).itemsize
    nf_p = _round_up(nf, sub)
    gc_p = _round_up(gc, sub)

    # Lane-aligned L tile; in-kernel window = T + one 128-lane halo block.
    T = max(128, min(_round_up(tile_l, 128), _round_up(L, 128)))
    L_pad = _round_up(L, T)
    n_lt = L_pad // T

    # Zero-pad: channel rows up to nf_p; _PAD_LEFT halo columns on the left,
    # the rest (incl. the trailing 128-lane halo block) on the right.
    xp = jnp.pad(x, ((0, 0), (0, nf_p - nf),
                     (_PAD_LEFT, L_pad + _HALO_BLOCK - _PAD_LEFT - L)))

    flat_w = _prep_params(params, nf, gc, nf_p, gc_p, compute_dtype)

    hb = T // _HALO_BLOCK
    in_specs = [
        pl.BlockSpec((None, nf_p, T), lambda n, j: (n, 0, j)),            # main
        pl.BlockSpec((None, nf_p, _HALO_BLOCK),
                     lambda n, j, hb=hb: (n, 0, (j + 1) * hb)),           # halo
    ]
    in_specs += [pl.BlockSpec(a.shape, lambda n, j: (0, 0)) for a in flat_w]
    out_spec = pl.BlockSpec((None, nf_p, T), lambda n, j: (n, 0, j))

    kernel = _make_kernel(nf_p, gc_p, L, T, compute_dtype)

    out_padded = pl.pallas_call(
        kernel,
        out_shape=jax.ShapeDtypeStruct((N, nf_p, L_pad), x.dtype),
        grid=(N, n_lt),
        in_specs=in_specs,
        out_specs=out_spec,
        scratch_shapes=[pltpu.VMEM((nf_p + 3 * gc_p, T + _HALO_BLOCK),
                                   compute_dtype)],
        compiler_params=pltpu.CompilerParams(
            dimension_semantics=("parallel", "parallel"),
            vmem_limit_bytes=32 * 1024 * 1024),
    )(xp, xp, *flat_w)

    return out_padded[:, :nf, :L]


# ---------------------------------------------------------------------------
# Pure-JAX reference (for correctness check)
# ---------------------------------------------------------------------------
def _conv1d_ref(x, w, b):
    y = lax.conv_general_dilated(
        x, w, window_strides=(1,), padding=((1, 1),),
        dimension_numbers=("NCH", "OIH", "NCH"))
    return y + b[None, :, None]


def ref_forward(x, params):
    (w1, b1), (w2, b2), (w3, b3), (w4, b4), (w5, b5) = params
    x1 = jnp.tanh(_conv1d_ref(x, w1, b1))
    x2 = jnp.tanh(_conv1d_ref(jnp.concatenate([x, x1], 1), w2, b2))
    x3 = jnp.tanh(_conv1d_ref(jnp.concatenate([x, x1, x2], 1), w3, b3))
    x4 = jnp.tanh(_conv1d_ref(jnp.concatenate([x, x1, x2, x3], 1), w4, b4))
    x5 = _conv1d_ref(jnp.concatenate([x, x1, x2, x3, x4], 1), w5, b5)
    return x5 * 0.2 + x


def init_params(key, nf, gc):
    specs = [(gc, nf), (gc, nf + gc), (gc, nf + 2 * gc),
             (gc, nf + 3 * gc), (nf, nf + 4 * gc)]
    params = []
    for (co, ci) in specs:
        key, kw, kb = jax.random.split(key, 3)
        w = jax.random.normal(kw, (co, ci, 3), jnp.float32) * 0.1
        b = jax.random.normal(kb, (co,), jnp.float32) * 0.1
        params.append((w, b))
    return params


if __name__ == "__main__":
    key = jax.random.PRNGKey(0)

    # Case 1: small aligned shapes, single L tile, f32 compute (tight check).
    N, nf, gc, L = 2, 32, 16, 16
    key, kx = jax.random.split(key)
    x = jax.random.normal(kx, (N, nf, L), jnp.float32)
    params = init_params(key, nf, gc)
    ref = jax.block_until_ready(ref_forward(x, params))

    out = jax.block_until_ready(
        residual_dense_block_5c(x, params, compute_dtype=jnp.float32))
    assert out.shape == (N, nf, L)
    assert jnp.allclose(out, ref, atol=1e-4, rtol=1e-4), (
        f"f32 max abs err {jnp.max(jnp.abs(out - ref))}")

    # Case 2: multiple L tiles (exercises the 128-lane halo path), f32.
    L2 = 300
    key, kx2 = jax.random.split(key)
    x2 = jax.random.normal(kx2, (N, nf, L2), jnp.float32)
    out2 = jax.block_until_ready(
        residual_dense_block_5c(x2, params, tile_l=128,
                                compute_dtype=jnp.float32))
    ref2 = jax.block_until_ready(ref_forward(x2, params))
    assert jnp.allclose(out2, ref2, atol=1e-4, rtol=1e-4), (
        f"tiled f32 max abs err {jnp.max(jnp.abs(out2 - ref2))}")

    # Case 3: default bf16 MXU operands (fast path); loose tolerance.
    out_bf = jax.block_until_ready(residual_dense_block_5c(x, params))
    assert jnp.allclose(out_bf, ref, atol=1e-1, rtol=1e-1), (
        f"bf16 max abs err {jnp.max(jnp.abs(out_bf - ref))}")

    # Case 4: channel counts not multiples of the sublane tile (padding path).
    nf4, gc4 = 12, 6
    key, kx4 = jax.random.split(key)
    xu = jax.random.normal(kx4, (N, nf4, L2), jnp.float32)
    params4 = init_params(key, nf4, gc4)
    out4 = jax.block_until_ready(
        residual_dense_block_5c(xu, params4, tile_l=128,
                                compute_dtype=jnp.float32))
    ref4 = jax.block_until_ready(ref_forward(xu, params4))
    assert jnp.allclose(out4, ref4, atol=1e-4, rtol=1e-4), (
        f"padded-channel f32 max abs err {jnp.max(jnp.abs(out4 - ref4))}")

    print("KERNEL_OK")
</pallas_src>

<mosaic_0001>
module attributes {stable_mosaic.version = 11 : i64} {
  func.func @kernel(%arg0: i32, %arg1: i32, %arg2: memref<1x32x128xf32, #tpu.memory_space<vmem>>, %arg3: memref<1x32x128xf32, #tpu.memory_space<vmem>>, %arg4: memref<48x32xf32, #tpu.memory_space<vmem>>, %arg5: memref<16x1xf32, #tpu.memory_space<vmem>>, %arg6: memref<48x32xf32, #tpu.memory_space<vmem>>, %arg7: memref<48x16xf32, #tpu.memory_space<vmem>>, %arg8: memref<16x1xf32, #tpu.memory_space<vmem>>, %arg9: memref<48x48xf32, #tpu.memory_space<vmem>>, %arg10: memref<48x16xf32, #tpu.memory_space<vmem>>, %arg11: memref<16x1xf32, #tpu.memory_space<vmem>>, %arg12: memref<48x64xf32, #tpu.memory_space<vmem>>, %arg13: memref<48x16xf32, #tpu.memory_space<vmem>>, %arg14: memref<16x1xf32, #tpu.memory_space<vmem>>, %arg15: memref<96x80xf32, #tpu.memory_space<vmem>>, %arg16: memref<96x16xf32, #tpu.memory_space<vmem>>, %arg17: memref<32x1xf32, #tpu.memory_space<vmem>>, %arg18: memref<1x32x128xf32, #tpu.memory_space<vmem>>, %arg19: memref<80x256xf32, #tpu.memory_space<vmem>>) attributes {dimension_semantics = [#tpu.dimension_semantics<parallel>, #tpu.dimension_semantics<parallel>], iteration_bounds = array<i64: 2, 1>, scalar_prefetch = 0 : i64, scratch_operands = 1 : i64, tpu.core_type = #tpu.core_type<tc>, window_params = [{transform_indices = @transform_0, window_bounds = array<i64: 1, 32, 128>}, {transform_indices = @transform_1, window_bounds = array<i64: 1, 32, 128>}, {pipeline_mode = #tpu.pipeline_mode<synchronous>, transform_indices = @transform_2, window_bounds = array<i64: 48, 32>}, {pipeline_mode = #tpu.pipeline_mode<synchronous>, transform_indices = @transform_3, window_bounds = array<i64: 16, 1>}, {pipeline_mode = #tpu.pipeline_mode<synchronous>, transform_indices = @transform_4, window_bounds = array<i64: 48, 32>}, {pipeline_mode = #tpu.pipeline_mode<synchronous>, transform_indices = @transform_5, window_bounds = array<i64: 48, 16>}, {pipeline_mode = #tpu.pipeline_mode<synchronous>, transform_indices = @transform_6, window_bounds = array<i64: 16, 1>}, {pipeline_mode = #tpu.pipeline_mode<synchronous>, transform_indices = @transform_7, window_bounds = array<i64: 48, 48>}, {pipeline_mode = #tpu.pipeline_mode<synchronous>, transform_indices = @transform_8, window_bounds = array<i64: 48, 16>}, {pipeline_mode = #tpu.pipeline_mode<synchronous>, transform_indices = @transform_9, window_bounds = array<i64: 16, 1>}, {pipeline_mode = #tpu.pipeline_mode<synchronous>, transform_indices = @transform_10, window_bounds = array<i64: 48, 64>}, {pipeline_mode = #tpu.pipeline_mode<synchronous>, transform_indices = @transform_11, window_bounds = array<i64: 48, 16>}, {pipeline_mode = #tpu.pipeline_mode<synchronous>, transform_indices = @transform_12, window_bounds = array<i64: 16, 1>}, {pipeline_mode = #tpu.pipeline_mode<synchronous>, transform_indices = @transform_13, window_bounds = array<i64: 96, 80>}, {pipeline_mode = #tpu.pipeline_mode<synchronous>, transform_indices = @transform_14, window_bounds = array<i64: 96, 16>}, {pipeline_mode = #tpu.pipeline_mode<synchronous>, transform_indices = @transform_15, window_bounds = array<i64: 32, 1>}, {transform_indices = @transform_16, window_bounds = array<i64: 1, 32, 128>}]} {
    %0 = tpu.iota {dimensions = array<i32: 1>} : vector<1x256xi32>
    %c128_i32 = arith.constant 128 : i32
    %1 = arith.muli %arg1, %c128_i32 : i32
    %c8_i32 = arith.constant 8 : i32
    %2 = arith.subi %1, %c8_i32 : i32
    %3 = vector.broadcast %2 : i32 to vector<1x256xi32>
    %4 = arith.addi %0, %3 : vector<1x256xi32>
    %c0_i32 = arith.constant 0 : i32
    %5 = vector.broadcast %c0_i32 : i32 to vector<1x256xi32>
    %6 = arith.cmpi sge, %4, %5 : vector<1x256xi32>
    %c16_i32 = arith.constant 16 : i32
    %7 = vector.broadcast %c16_i32 : i32 to vector<1x256xi32>
    %8 = arith.cmpi slt, %4, %7 : vector<1x256xi32>
    %9 = arith.andi %6, %8 : vector<1x256xi1>
    %10 = arith.extui %9 : vector<1x256xi1> to vector<1x256xi32>
    %11 = arith.sitofp %10 : vector<1x256xi32> to vector<1x256xf32>
    %c0 = arith.constant 0 : index
    %c0_0 = arith.constant 0 : index
    %c0_1 = arith.constant 0 : index
    %12 = vector.load %arg2[%c0, %c0_0, %c0_1] : memref<1x32x128xf32, #tpu.memory_space<vmem>>, vector<1x32x128xf32>
    %13 = vector.shape_cast %12 : vector<1x32x128xf32> to vector<32x128xf32>
    %c0_2 = arith.constant 0 : index
    %c0_3 = arith.constant 0 : index
    %c0_4 = arith.constant 0 : index
    %14 = vector.load %arg3[%c0_2, %c0_3, %c0_4] : memref<1x32x128xf32, #tpu.memory_space<vmem>>, vector<1x32x128xf32>
    %15 = vector.shape_cast %14 : vector<1x32x128xf32> to vector<32x128xf32>
    %16 = tpu.concatenate %13, %15 in 1 : vector<32x128xf32>, vector<32x128xf32> -> vector<32x256xf32>
    %c0_5 = arith.constant 0 : index
    %c0_6 = arith.constant 0 : index
    %17 = vector.load %arg19[%c0_5, %c0_6] : memref<80x256xf32, #tpu.memory_space<vmem>>, vector<32x256xf32>
    tpu.vector_store %arg19[%c0_5, %c0_6], %16 {strides = array<i32>} : memref<80x256xf32, #tpu.memory_space<vmem>>, vector<32x256xf32>,
    %c0_7 = arith.constant 0 : index
    %c0_8 = arith.constant 0 : index
    %18 = vector.load %arg4[%c0_7, %c0_8] : memref<48x32xf32, #tpu.memory_space<vmem>>, vector<48x32xf32>
    %cst = arith.constant dense<0.000000e+00> : vector<48x256xf32>
    %19 = tpu.matmul %18, %16, %cst {dimension_numbers = #tpu.dot_dimension_numbers<[1], [0], [0], [1], [0, 0, 1, 1], [], []>} : vector<48x32xf32>, vector<32x256xf32>, vector<48x256xf32> -> vector<48x256xf32>
    %c0_9 = arith.constant 0 : index
    %c0_10 = arith.constant 0 : index
    %20 = vector.load %arg5[%c0_9, %c0_10] : memref<16x1xf32, #tpu.memory_space<vmem>>, vector<16x1xf32>
    %21 = vector.extract_strided_slice %19 {offsets = [0, 0], sizes = [16, 256], strides = [1, 1]} : vector<48x256xf32> to vector<16x256xf32>
    %22 = vector.extract_strided_slice %19 {offsets = [16, 0], sizes = [16, 256], strides = [1, 1]} : vector<48x256xf32> to vector<16x256xf32>
    %23 = vector.extract_strided_slice %19 {offsets = [32, 0], sizes = [16, 256], strides = [1, 1]} : vector<48x256xf32> to vector<16x256xf32>
    %24 = vector.broadcast %20 : vector<16x1xf32> to vector<16x256xf32>
    %25 = arith.addf %24, %22 : vector<16x256xf32>
    %c1_i32 = arith.constant 1 : i32
    %26 = tpu.dynamic_rotate %21 by %c1_i32 dim 1 : vector<16x256xf32>, i32 -> vector<16x256xf32>
    %27 = arith.addf %25, %26 : vector<16x256xf32>
    %c255_i32 = arith.constant 255 : i32
    %28 = tpu.dynamic_rotate %23 by %c255_i32 dim 1 : vector<16x256xf32>, i32 -> vector<16x256xf32>
    %29 = arith.addf %27, %28 : vector<16x256xf32>
    %c0_11 = arith.constant 0 : index
    %c0_12 = arith.constant 0 : index
    %30 = vector.load %arg6[%c0_11, %c0_12] : memref<48x32xf32, #tpu.memory_space<vmem>>, vector<48x32xf32>
    %cst_13 = arith.constant dense<0.000000e+00> : vector<48x256xf32>
    %31 = tpu.matmul %30, %16, %cst_13 {dimension_numbers = #tpu.dot_dimension_numbers<[1], [0], [0], [1], [0, 0, 1, 1], [], []>} : vector<48x32xf32>, vector<32x256xf32>, vector<48x256xf32> -> vector<48x256xf32>
    %32 = math.tanh %29 : vector<16x256xf32>
    %33 = vector.broadcast %11 : vector<1x256xf32> to vector<16x256xf32>
    %34 = arith.mulf %32, %33 : vector<16x256xf32>
    %c32 = arith.constant 32 : index
    %c0_14 = arith.constant 0 : index
    %35 = vector.load %arg19[%c32, %c0_14] : memref<80x256xf32, #tpu.memory_space<vmem>>, vector<16x256xf32>
    tpu.vector_store %arg19[%c32, %c0_14], %34 {strides = array<i32>} : memref<80x256xf32, #tpu.memory_space<vmem>>, vector<16x256xf32>,
    %c0_15 = arith.constant 0 : index
    %c0_16 = arith.constant 0 : index
    %36 = vector.load %arg7[%c0_15, %c0_16] : memref<48x16xf32, #tpu.memory_space<vmem>>, vector<48x16xf32>
    %cst_17 = arith.constant dense<0.000000e+00> : vector<48x256xf32>
    %37 = tpu.matmul %36, %34, %cst_17 {dimension_numbers = #tpu.dot_dimension_numbers<[1], [0], [0], [1], [0, 0, 1, 1], [], []>} : vector<48x16xf32>, vector<16x256xf32>, vector<48x256xf32> -> vector<48x256xf32>
    %38 = arith.addf %31, %37 : vector<48x256xf32>
    %c0_18 = arith.constant 0 : index
    %c0_19 = arith.constant 0 : index
    %39 = vector.load %arg8[%c0_18, %c0_19] : memref<16x1xf32, #tpu.memory_space<vmem>>, vector<16x1xf32>
    %40 = vector.extract_strided_slice %38 {offsets = [0, 0], sizes = [16, 256], strides = [1, 1]} : vector<48x256xf32> to vector<16x256xf32>
    %41 = vector.extract_strided_slice %38 {offsets = [16, 0], sizes = [16, 256], strides = [1, 1]} : vector<48x256xf32> to vector<16x256xf32>
    %42 = vector.extract_strided_slice %38 {offsets = [32, 0], sizes = [16, 256], strides = [1, 1]} : vector<48x256xf32> to vector<16x256xf32>
    %43 = vector.broadcast %39 : vector<16x1xf32> to vector<16x256xf32>
    %44 = arith.addf %43, %41 : vector<16x256xf32>
    %c1_i32_20 = arith.constant 1 : i32
    %45 = tpu.dynamic_rotate %40 by %c1_i32_20 dim 1 : vector<16x256xf32>, i32 -> vector<16x256xf32>
    %46 = arith.addf %44, %45 : vector<16x256xf32>
    %c255_i32_21 = arith.constant 255 : i32
    %47 = tpu.dynamic_rotate %42 by %c255_i32_21 dim 1 : vector<16x256xf32>, i32 -> vector<16x256xf32>
    %48 = arith.addf %46, %47 : vector<16x256xf32>
    %c0_22 = arith.constant 0 : index
    %c0_23 = arith.constant 0 : index
    %49 = vector.load %arg19[%c0_22, %c0_23] : memref<80x256xf32, #tpu.memory_space<vmem>>, vector<48x256xf32>
    %c0_24 = arith.constant 0 : index
    %c0_25 = arith.constant 0 : index
    %50 = vector.load %arg9[%c0_24, %c0_25] : memref<48x48xf32, #tpu.memory_space<vmem>>, vector<48x48xf32>
    %cst_26 = arith.constant dense<0.000000e+00> : vector<48x256xf32>
    %51 = tpu.matmul %50, %49, %cst_26 {dimension_numbers = #tpu.dot_dimension_numbers<[1], [0], [0], [1], [0, 0, 1, 1], [], []>} : vector<48x48xf32>, vector<48x256xf32>, vector<48x256xf32> -> vector<48x256xf32>
    %52 = math.tanh %48 : vector<16x256xf32>
    %53 = vector.broadcast %11 : vector<1x256xf32> to vector<16x256xf32>
    %54 = arith.mulf %52, %53 : vector<16x256xf32>
    %c48 = arith.constant 48 : index
    %c0_27 = arith.constant 0 : index
    %55 = vector.load %arg19[%c48, %c0_27] : memref<80x256xf32, #tpu.memory_space<vmem>>, vector<16x256xf32>
    tpu.vector_store %arg19[%c48, %c0_27], %54 {strides = array<i32>} : memref<80x256xf32, #tpu.memory_space<vmem>>, vector<16x256xf32>,
    %c0_28 = arith.constant 0 : index
    %c0_29 = arith.constant 0 : index
    %56 = vector.load %arg10[%c0_28, %c0_29] : memref<48x16xf32, #tpu.memory_space<vmem>>, vector<48x16xf32>
    %cst_30 = arith.constant dense<0.000000e+00> : vector<48x256xf32>
    %57 = tpu.matmul %56, %54, %cst_30 {dimension_numbers = #tpu.dot_dimension_numbers<[1], [0], [0], [1], [0, 0, 1, 1], [], []>} : vector<48x16xf32>, vector<16x256xf32>, vector<48x256xf32> -> vector<48x256xf32>
    %58 = arith.addf %51, %57 : vector<48x256xf32>
    %c0_31 = arith.constant 0 : index
    %c0_32 = arith.constant 0 : index
    %59 = vector.load %arg11[%c0_31, %c0_32] : memref<16x1xf32, #tpu.memory_space<vmem>>, vector<16x1xf32>
    %60 = vector.extract_strided_slice %58 {offsets = [0, 0], sizes = [16, 256], strides = [1, 1]} : vector<48x256xf32> to vector<16x256xf32>
    %61 = vector.extract_strided_slice %58 {offsets = [16, 0], sizes = [16, 256], strides = [1, 1]} : vector<48x256xf32> to vector<16x256xf32>
    %62 = vector.extract_strided_slice %58 {offsets = [32, 0], sizes = [16, 256], strides = [1, 1]} : vector<48x256xf32> to vector<16x256xf32>
    %63 = vector.broadcast %59 : vector<16x1xf32> to vector<16x256xf32>
    %64 = arith.addf %63, %61 : vector<16x256xf32>
    %c1_i32_33 = arith.constant 1 : i32
    %65 = tpu.dynamic_rotate %60 by %c1_i32_33 dim 1 : vector<16x256xf32>, i32 -> vector<16x256xf32>
    %66 = arith.addf %64, %65 : vector<16x256xf32>
    %c255_i32_34 = arith.constant 255 : i32
    %67 = tpu.dynamic_rotate %62 by %c255_i32_34 dim 1 : vector<16x256xf32>, i32 -> vector<16x256xf32>
    %68 = arith.addf %66, %67 : vector<16x256xf32>
    %c0_35 = arith.constant 0 : index
    %c0_36 = arith.constant 0 : index
    %69 = vector.load %arg19[%c0_35, %c0_36] : memref<80x256xf32, #tpu.memory_space<vmem>>, vector<64x256xf32>
    %c0_37 = arith.constant 0 : index
    %c0_38 = arith.constant 0 : index
    %70 = vector.load %arg12[%c0_37, %c0_38] : memref<48x64xf32, #tpu.memory_space<vmem>>, vector<48x64xf32>
    %cst_39 = arith.constant dense<0.000000e+00> : vector<48x256xf32>
    %71 = tpu.matmul %70, %69, %cst_39 {dimension_numbers = #tpu.dot_dimension_numbers<[1], [0], [0], [1], [0, 0, 1, 1], [], []>} : vector<48x64xf32>, vector<64x256xf32>, vector<48x256xf32> -> vector<48x256xf32>
    %72 = math.tanh %68 : vector<16x256xf32>
    %73 = vector.broadcast %11 : vector<1x256xf32> to vector<16x256xf32>
    %74 = arith.mulf %72, %73 : vector<16x256xf32>
    %c64 = arith.constant 64 : index
    %c0_40 = arith.constant 0 : index
    %75 = vector.load %arg19[%c64, %c0_40] : memref<80x256xf32, #tpu.memory_space<vmem>>, vector<16x256xf32>
    tpu.vector_store %arg19[%c64, %c0_40], %74 {strides = array<i32>} : memref<80x256xf32, #tpu.memory_space<vmem>>, vector<16x256xf32>,
    %c0_41 = arith.constant 0 : index
    %c0_42 = arith.constant 0 : index
    %76 = vector.load %arg13[%c0_41, %c0_42] : memref<48x16xf32, #tpu.memory_space<vmem>>, vector<48x16xf32>
    %cst_43 = arith.constant dense<0.000000e+00> : vector<48x256xf32>
    %77 = tpu.matmul %76, %74, %cst_43 {dimension_numbers = #tpu.dot_dimension_numbers<[1], [0], [0], [1], [0, 0, 1, 1], [], []>} : vector<48x16xf32>, vector<16x256xf32>, vector<48x256xf32> -> vector<48x256xf32>
    %78 = arith.addf %71, %77 : vector<48x256xf32>
    %c0_44 = arith.constant 0 : index
    %c0_45 = arith.constant 0 : index
    %79 = vector.load %arg14[%c0_44, %c0_45] : memref<16x1xf32, #tpu.memory_space<vmem>>, vector<16x1xf32>
    %80 = vector.extract_strided_slice %78 {offsets = [0, 0], sizes = [16, 256], strides = [1, 1]} : vector<48x256xf32> to vector<16x256xf32>
    %81 = vector.extract_strided_slice %78 {offsets = [16, 0], sizes = [16, 256], strides = [1, 1]} : vector<48x256xf32> to vector<16x256xf32>
    %82 = vector.extract_strided_slice %78 {offsets = [32, 0], sizes = [16, 256], strides = [1, 1]} : vector<48x256xf32> to vector<16x256xf32>
    %83 = vector.broadcast %79 : vector<16x1xf32> to vector<16x256xf32>
    %84 = arith.addf %83, %81 : vector<16x256xf32>
    %c1_i32_46 = arith.constant 1 : i32
    %85 = tpu.dynamic_rotate %80 by %c1_i32_46 dim 1 : vector<16x256xf32>, i32 -> vector<16x256xf32>
    %86 = arith.addf %84, %85 : vector<16x256xf32>
    %c255_i32_47 = arith.constant 255 : i32
    %87 = tpu.dynamic_rotate %82 by %c255_i32_47 dim 1 : vector<16x256xf32>, i32 -> vector<16x256xf32>
    %88 = arith.addf %86, %87 : vector<16x256xf32>
    %c0_48 = arith.constant 0 : index
    %c0_49 = arith.constant 0 : index
    %89 = vector.load %arg19[%c0_48, %c0_49] : memref<80x256xf32, #tpu.memory_space<vmem>>, vector<80x256xf32>
    %c0_50 = arith.constant 0 : index
    %c0_51 = arith.constant 0 : index
    %90 = vector.load %arg15[%c0_50, %c0_51] : memref<96x80xf32, #tpu.memory_space<vmem>>, vector<96x80xf32>
    %cst_52 = arith.constant dense<0.000000e+00> : vector<96x256xf32>
    %91 = tpu.matmul %90, %89, %cst_52 {dimension_numbers = #tpu.dot_dimension_numbers<[1], [0], [0], [1], [0, 0, 1, 1], [], []>} : vector<96x80xf32>, vector<80x256xf32>, vector<96x256xf32> -> vector<96x256xf32>
    %92 = math.tanh %88 : vector<16x256xf32>
    %93 = vector.broadcast %11 : vector<1x256xf32> to vector<16x256xf32>
    %94 = arith.mulf %92, %93 : vector<16x256xf32>
    %c0_53 = arith.constant 0 : index
    %c0_54 = arith.constant 0 : index
    %95 = vector.load %arg16[%c0_53, %c0_54] : memref<96x16xf32, #tpu.memory_space<vmem>>, vector<96x16xf32>
    %cst_55 = arith.constant dense<0.000000e+00> : vector<96x256xf32>
    %96 = tpu.matmul %95, %94, %cst_55 {dimension_numbers = #tpu.dot_dimension_numbers<[1], [0], [0], [1], [0, 0, 1, 1], [], []>} : vector<96x16xf32>, vector<16x256xf32>, vector<96x256xf32> -> vector<96x256xf32>
    %97 = arith.addf %91, %96 : vector<96x256xf32>
    %c0_56 = arith.constant 0 : index
    %c0_57 = arith.constant 0 : index
    %98 = vector.load %arg17[%c0_56, %c0_57] : memref<32x1xf32, #tpu.memory_space<vmem>>, vector<32x1xf32>
    %99 = vector.extract_strided_slice %97 {offsets = [0, 0], sizes = [32, 256], strides = [1, 1]} : vector<96x256xf32> to vector<32x256xf32>
    %100 = vector.extract_strided_slice %97 {offsets = [32, 0], sizes = [32, 256], strides = [1, 1]} : vector<96x256xf32> to vector<32x256xf32>
    %101 = vector.extract_strided_slice %97 {offsets = [64, 0], sizes = [32, 256], strides = [1, 1]} : vector<96x256xf32> to vector<32x256xf32>
    %102 = vector.broadcast %98 : vector<32x1xf32> to vector<32x256xf32>
    %103 = arith.addf %102, %100 : vector<32x256xf32>
    %c1_i32_58 = arith.constant 1 : i32
    %104 = tpu.dynamic_rotate %99 by %c1_i32_58 dim 1 : vector<32x256xf32>, i32 -> vector<32x256xf32>
    %105 = arith.addf %103, %104 : vector<32x256xf32>
    %c255_i32_59 = arith.constant 255 : i32
    %106 = tpu.dynamic_rotate %101 by %c255_i32_59 dim 1 : vector<32x256xf32>, i32 -> vector<32x256xf32>
    %107 = arith.addf %105, %106 : vector<32x256xf32>
    %cst_60 = arith.constant 2.000000e-01 : f32
    %108 = vector.broadcast %cst_60 : f32 to vector<32x256xf32>
    %109 = arith.mulf %107, %108 : vector<32x256xf32>
    %110 = arith.addf %109, %16 : vector<32x256xf32>
    %111 = vector.extract_strided_slice %110 {offsets = [0, 8], sizes = [32, 128], strides = [1, 1]} : vector<32x256xf32> to vector<32x128xf32>
    %c0_61 = arith.constant 0 : index
    %c0_62 = arith.constant 0 : index
    %c0_63 = arith.constant 0 : index
    %112 = vector.load %arg18[%c0_61, %c0_62, %c0_63] : memref<1x32x128xf32, #tpu.memory_space<vmem>>, vector<1x32x128xf32>
    %113 = vector.shape_cast %112 : vector<1x32x128xf32> to vector<32x128xf32>
    %114 = vector.shape_cast %111 : vector<32x128xf32> to vector<1x32x128xf32>
    tpu.vector_store %arg18[%c0_61, %c0_62, %c0_63], %114 {strides = array<i32>} : memref<1x32x128xf32, #tpu.memory_space<vmem>>, vector<1x32x128xf32>,
    return
  }
  func.func @transform_0(%arg0: i32, %arg1: i32) -> (i32, i32, i32) {
    %c0_i32 = arith.constant 0 : i32
    %c0_i32_0 = arith.constant 0 : i32
    return %arg0, %c0_i32, %arg1 : i32, i32, i32
  }
  func.func @transform_1(%arg0: i32, %arg1: i32) -> (i32, i32, i32) {
    %c1_i32 = arith.constant 1 : i32
    %0 = arith.addi %arg1, %c1_i32 : i32
    %c1_i32_0 = arith.constant 1 : i32
    %1 = arith.muli %0, %c1_i32_0 : i32
    %c0_i32 = arith.constant 0 : i32
    %c0_i32_1 = arith.constant 0 : i32
    return %arg0, %c0_i32, %1 : i32, i32, i32
  }
  func.func @transform_2(%arg0: i32, %arg1: i32) -> (i32, i32) {
    %c0_i32 = arith.constant 0 : i32
    %c0_i32_0 = arith.constant 0 : i32
    %c0_i32_1 = arith.constant 0 : i32
    return %c0_i32, %c0_i32_0 : i32, i32
  }
  func.func @transform_3(%arg0: i32, %arg1: i32) -> (i32, i32) {
    %c0_i32 = arith.constant 0 : i32
    %c0_i32_0 = arith.constant 0 : i32
    %c0_i32_1 = arith.constant 0 : i32
    return %c0_i32, %c0_i32_0 : i32, i32
  }
  func.func @transform_4(%arg0: i32, %arg1: i32) -> (i32, i32) {
    %c0_i32 = arith.constant 0 : i32
    %c0_i32_0 = arith.constant 0 : i32
    %c0_i32_1 = arith.constant 0 : i32
    return %c0_i32, %c0_i32_0 : i32, i32
  }
  func.func @transform_5(%arg0: i32, %arg1: i32) -> (i32, i32) {
    %c0_i32 = arith.constant 0 : i32
    %c0_i32_0 = arith.constant 0 : i32
    %c0_i32_1 = arith.constant 0 : i32
    return %c0_i32, %c0_i32_0 : i32, i32
  }
  func.func @transform_6(%arg0: i32, %arg1: i32) -> (i32, i32) {
    %c0_i32 = arith.constant 0 : i32
    %c0_i32_0 = arith.constant 0 : i32
    %c0_i32_1 = arith.constant 0 : i32
    return %c0_i32, %c0_i32_0 : i32, i32
  }
  func.func @transform_7(%arg0: i32, %arg1: i32) -> (i32, i32) {
    %c0_i32 = arith.constant 0 : i32
    %c0_i32_0 = arith.constant 0 : i32
    %c0_i32_1 = arith.constant 0 : i32
    return %c0_i32, %c0_i32_0 : i32, i32
  }
  func.func @transform_8(%arg0: i32, %arg1: i32) -> (i32, i32) {
    %c0_i32 = arith.constant 0 : i32
    %c0_i32_0 = arith.constant 0 : i32
    %c0_i32_1 = arith.constant 0 : i32
    return %c0_i32, %c0_i32_0 : i32, i32
  }
  func.func @transform_9(%arg0: i32, %arg1: i32) -> (i32, i32) {
    %c0_i32 = arith.constant 0 : i32
    %c0_i32_0 = arith.constant 0 : i32
    %c0_i32_1 = arith.constant 0 : i32
    return %c0_i32, %c0_i32_0 : i32, i32
  }
  func.func @transform_10(%arg0: i32, %arg1: i32) -> (i32, i32) {
    %c0_i32 = arith.constant 0 : i32
    %c0_i32_0 = arith.constant 0 : i32
    %c0_i32_1 = arith.constant 0 : i32
    return %c0_i32, %c0_i32_0 : i32, i32
  }
  func.func @transform_11(%arg0: i32, %arg1: i32) -> (i32, i32) {
    %c0_i32 = arith.constant 0 : i32
    %c0_i32_0 = arith.constant 0 : i32
    %c0_i32_1 = arith.constant 0 : i32
    return %c0_i32, %c0_i32_0 : i32, i32
  }
  func.func @transform_12(%arg0: i32, %arg1: i32) -> (i32, i32) {
    %c0_i32 = arith.constant 0 : i32
    %c0_i32_0 = arith.constant 0 : i32
    %c0_i32_1 = arith.constant 0 : i32
    return %c0_i32, %c0_i32_0 : i32, i32
  }
  func.func @transform_13(%arg0: i32, %arg1: i32) -> (i32, i32) {
    %c0_i32 = arith.constant 0 : i32
    %c0_i32_0 = arith.constant 0 : i32
    %c0_i32_1 = arith.constant 0 : i32
    return %c0_i32, %c0_i32_0 : i32, i32
  }
  func.func @transform_14(%arg0: i32, %arg1: i32) -> (i32, i32) {
    %c0_i32 = arith.constant 0 : i32
    %c0_i32_0 = arith.constant 0 : i32
    %c0_i32_1 = arith.constant 0 : i32
    return %c0_i32, %c0_i32_0 : i32, i32
  }
  func.func @transform_15(%arg0: i32, %arg1: i32) -> (i32, i32) {
    %c0_i32 = arith.constant 0 : i32
    %c0_i32_0 = arith.constant 0 : i32
    %c0_i32_1 = arith.constant 0 : i32
    return %c0_i32, %c0_i32_0 : i32, i32
  }
  func.func @transform_16(%arg0: i32, %arg1: i32) -> (i32, i32, i32) {
    %c0_i32 = arith.constant 0 : i32
    %c0_i32_0 = arith.constant 0 : i32
    return %arg0, %c0_i32, %arg1 : i32, i32, i32
  }
}

</mosaic_0001>

<llo_original>
// kernel: tpu_custom_call.1
$region0: #{tpu_custom_call.1}
  #allocation0 [shape = 'u32[]', space=smem, size = 0x4, offset = 0x4, fixed_abs, tag = 'smem constant byte address 0x4 - core index']
  #allocation1 [shape = 'u32[144,128]{1,0:T(1,128)}', space=vmem, size = 0x12000, scoped, tag = 'internal scratch']
  #allocation2 [shape = 'f32[80,256]{1,0:T(8,128)}', space=vmem, size = 0x14000, scoped, tag = 'scratch operand']
  %s0 = inlined_call_operand.vmem [shape: f32[2,32,256], index: 0, kind: input, shape index: {}]
  %s1 = inlined_call_operand.vmem [shape: f32[2,32,256], index: 1, kind: input, shape index: {}]
  %s2 = inlined_call_operand.vmem [shape: f32[48,32], index: 2, kind: input, shape index: {}]
  %s3 = inlined_call_operand.vmem [shape: f32[16,1], index: 3, kind: input, shape index: {}]
  %s4 = inlined_call_operand.vmem [shape: f32[48,32], index: 4, kind: input, shape index: {}]
  %s5 = inlined_call_operand.vmem [shape: f32[48,16], index: 5, kind: input, shape index: {}]
  %s6 = inlined_call_operand.vmem [shape: f32[16,1], index: 6, kind: input, shape index: {}]
  %s7 = inlined_call_operand.vmem [shape: f32[48,48], index: 7, kind: input, shape index: {}]
  %s8 = inlined_call_operand.vmem [shape: f32[48,16], index: 8, kind: input, shape index: {}]
  %s9 = inlined_call_operand.vmem [shape: f32[16,1], index: 9, kind: input, shape index: {}]
  %s10 = inlined_call_operand.vmem [shape: f32[48,64], index: 10, kind: input, shape index: {}]
  %s11 = inlined_call_operand.vmem [shape: f32[48,16], index: 11, kind: input, shape index: {}]
  %s12 = inlined_call_operand.vmem [shape: f32[16,1], index: 12, kind: input, shape index: {}]
  %s13 = inlined_call_operand.vmem [shape: f32[96,80], index: 13, kind: input, shape index: {}]
  %s14 = inlined_call_operand.vmem [shape: f32[96,16], index: 14, kind: input, shape index: {}]
  %s15 = inlined_call_operand.vmem [shape: f32[32,1], index: 15, kind: input, shape index: {}]
  %s16 = inlined_call_operand.hbm [shape: f32[2,32,128], index: 16, kind: output, shape index: {}]
  %s17 = sld [smem:[#allocation0]]
  $region173: #{tpu_custom_call.1} parent=0
    _
  %s19 = ssub.s32 1, %s17
  %s20 = scalar_select 0, %s19, %s17
  $region1: #{tpu_custom_call.1} parent=0
    #allocation3 [shape = 'u8[32768]{0}', space=vmem, size = 0x8000, scoped, tag = 'input window, operand 0']
    #allocation4 [shape = 'u8[32768]{0}', space=vmem, size = 0x8000, scoped, tag = 'input window, operand 1']
    #allocation5 [shape = 'u8[32768]{0}', space=vmem, size = 0x8000, scoped, tag = 'output window, operand 0']
    #allocation6 [shape = 's32[2]{0}', space=sflag, size = 0x8, scoped, tag = 'scoped memory for tpu_custom_call.1']
    %21 = vsyncpa [#allocation6], 0
    %s22 = scalar_lea.sflag [#allocation6], 1
    %23 = vsyncpa %s22, 0
    loop: start=0, step=1, limit=4
    $region2: #{tpu_custom_call.1} parent=1 // loop_pre_header
      _
    $region3: #{tpu_custom_call.1} parent=1 // loop_header
      %s25 = sphi 0, %s29
      %p26 = scmp.ge.s32.totalorder %s25, 4
      %s32 = sphi 0, %s44
      %s33 = sphi 0, %s40
      %s34 = sphi 0, %s32
      %s35 = sphi 0, %s33
      %s36 = sphi 0, %s34
      %s37 = sphi 0, %s35
      %s49 = sphi 0, %s51
      %s52 = sphi 0, %s49
      %s53 = sphi 0, %s52
      %s69 = sphi 0, %s53
      %s79 = sphi 0, %s81
      %s82 = sphi 0, %s79
      %s83 = sphi 0, %s82
      %s99 = sphi 0, %s83
      %s103 = sphi 0, %s103
      %s105 = sphi 0, %s103
      %s106 = sphi 0, %s105
      %s120 = sphi 0, %s106
      %s124 = sphi 0, %s124
      %s126 = sphi 0, %s124
      %s127 = sphi 0, %s126
      %s141 = sphi 0, %s127
      %s145 = sphi 0, %s145
      %s147 = sphi 0, %s145
      %s148 = sphi 0, %s147
      %s162 = sphi 0, %s148
      %s166 = sphi 0, %s166
      %s168 = sphi 0, %s166
      %s169 = sphi 0, %s168
      %s183 = sphi 0, %s169
      %s187 = sphi 0, %s187
      %s189 = sphi 0, %s187
      %s190 = sphi 0, %s189
      %s204 = sphi 0, %s190
      %s208 = sphi 0, %s208
      %s210 = sphi 0, %s208
      %s211 = sphi 0, %s210
      %s225 = sphi 0, %s211
      %s229 = sphi 0, %s229
      %s231 = sphi 0, %s229
      %s232 = sphi 0, %s231
      %s246 = sphi 0, %s232
      %s250 = sphi 0, %s250
      %s252 = sphi 0, %s250
      %s253 = sphi 0, %s252
      %s267 = sphi 0, %s253
      %s271 = sphi 0, %s271
      %s273 = sphi 0, %s271
      %s274 = sphi 0, %s273
      %s288 = sphi 0, %s274
      %s292 = sphi 0, %s292
      %s294 = sphi 0, %s292
      %s295 = sphi 0, %s294
      %s309 = sphi 0, %s295
      %s313 = sphi 0, %s313
      %s315 = sphi 0, %s313
      %s316 = sphi 0, %s315
      %s330 = sphi 0, %s316
      %s334 = sphi 0, %s334
      %s336 = sphi 0, %s334
      %s337 = sphi 0, %s336
      %s351 = sphi 0, %s337
      %s355 = sphi 0, %s355
      %s357 = sphi 0, %s355
      %s358 = sphi 0, %s357
      %s372 = sphi 0, %s358
      %s376 = sphi 0, %s376
      %s378 = sphi 0, %s376
      %s379 = sphi 0, %s378
      %s393 = sphi 0, %s379
      %s401 = sphi 0, %s403
      %s404 = sphi 0, %s401
      %s405 = sphi 0, %s404
      %s421 = sphi 0, %s405
    $region4: #{tpu_custom_call.1} parent=1 // loop_header_branch
      %28 = sbr.rel (%p26) target = $region8
    $region5: #{tpu_custom_call.1} parent=1 // loop_body
      %s30 = ssub.s32 %s25, 1
      %s31 = ssub.s32 %s25, 2
      %s38 = sadd.s32 1, %s33
      %p39 = scmp.ge.s32.totalorder %s38, 1
      %s40 = scalar_select %p39, 0, %s38
      %s41 = sadd.s32 1, %s32
      %s42 = scalar_select %p39, %s41, %s32
      %p43 = scmp.ge.s32.totalorder %s42, 2
      %s44 = scalar_select %p43, 0, %s42
      %s45 = ssub.s32 %s32, %s44
      %s46 = ssub.s32 %s33, %s40
      %s47 = sor.u32 %s45, %s46
      %p48 = scmp.eq.s32.totalorder %s47, 0
      %s50 = sadd.s32 %s49, 1
      %s51 = scalar_select %p48, %s49, %s50
      %p54 = pneg %p48
      %p55 = scmp.eq.s32.totalorder %s25, 1
      %p56 = por %p54, %p55
      %p57 = scmp.ne.s32.totalorder %s49, %s52
      %p58 = scmp.eq.s32.totalorder %s25, 0
      %p59 = por %p57, %p58
      %p60 = scmp.ne.s32.totalorder %s49, %s52
      %p61 = scmp.eq.s32.totalorder %s30, 1
      %p62 = por %p60, %p61
      %p63 = scmp.ne.s32.totalorder %s52, %s53
      %p64 = scmp.eq.s32.totalorder %s30, 0
      %p65 = por %p63, %p64
      %p66 = scmp.ne.s32.totalorder %s52, %s53
      %p67 = scmp.eq.s32.totalorder %s31, 1
      %p68 = por %p66, %p67
      %p70 = scmp.ne.s32.totalorder %s53, %s69
      %p71 = scmp.eq.s32.totalorder %s31, 0
      %p72 = por %p70, %p71
      %s73 = sadd.s32 %s33, 1
      %s74 = sadd.s32 %s40, 1
      %s75 = ssub.s32 %s32, %s44
      %s76 = ssub.s32 %s73, %s74
      %s77 = sor.u32 %s75, %s76
      %p78 = scmp.eq.s32.totalorder %s77, 0
      %s80 = sadd.s32 %s79, 1
      %s81 = scalar_select %p78, %s79, %s80
      %p84 = pneg %p78
      %p85 = scmp.eq.s32.totalorder %s25, 1
      %p86 = por %p84, %p85
      %p87 = scmp.ne.s32.totalorder %s79, %s82
      %p88 = scmp.eq.s32.totalorder %s25, 0
      %p89 = por %p87, %p88
      %p90 = scmp.ne.s32.totalorder %s79, %s82
      %p91 = scmp.eq.s32.totalorder %s30, 1
      %p92 = por %p90, %p91
      %p93 = scmp.ne.s32.totalorder %s82, %s83
      %p94 = scmp.eq.s32.totalorder %s30, 0
      %p95 = por %p93, %p94
      %p96 = scmp.ne.s32.totalorder %s82, %s83
      %p97 = scmp.eq.s32.totalorder %s31, 1
      %p98 = por %p96, %p97
      %p100 = scmp.ne.s32.totalorder %s83, %s99
      %p101 = scmp.eq.s32.totalorder %s31, 0
      %p102 = por %p100, %p101
      %s104 = sadd.s32 %s103, 1
      %p107 = scmp.eq.s32.totalorder %s25, 1
      %p108 = scmp.ne.s32.totalorder %s103, %s105
      %p109 = scmp.eq.s32.totalorder %s25, 0
      %p110 = por %p108, %p109
      %p111 = scmp.ne.s32.totalorder %s103, %s105
      %p112 = scmp.eq.s32.totalorder %s30, 1
      %p113 = por %p111, %p112
      %p114 = scmp.ne.s32.totalorder %s105, %s106
      %p115 = scmp.eq.s32.totalorder %s30, 0
      %p116 = por %p114, %p115
      %p117 = scmp.ne.s32.totalorder %s105, %s106
      %p118 = scmp.eq.s32.totalorder %s31, 1
      %p119 = por %p117, %p118
      %p121 = scmp.ne.s32.totalorder %s106, %s120
      %p122 = scmp.eq.s32.totalorder %s31, 0
      %p123 = por %p121, %p122
      %s125 = sadd.s32 %s124, 1
      %p128 = scmp.eq.s32.totalorder %s25, 1
      %p129 = scmp.ne.s32.totalorder %s124, %s126
      %p130 = scmp.eq.s32.totalorder %s25, 0
      %p131 = por %p129, %p130
      %p132 = scmp.ne.s32.totalorder %s124, %s126
      %p133 = scmp.eq.s32.totalorder %s30, 1
      %p134 = por %p132, %p133
      %p135 = scmp.ne.s32.totalorder %s126, %s127
      %p136 = scmp.eq.s32.totalorder %s30, 0
      %p137 = por %p135, %p136
      %p138 = scmp.ne.s32.totalorder %s126, %s127
      %p139 = scmp.eq.s32.totalorder %s31, 1
      %p140 = por %p138, %p139
      %p142 = scmp.ne.s32.totalorder %s127, %s141
      %p143 = scmp.eq.s32.totalorder %s31, 0
      %p144 = por %p142, %p143
      %s146 = sadd.s32 %s145, 1
      %p149 = scmp.eq.s32.totalorder %s25, 1
      %p150 = scmp.ne.s32.totalorder %s145, %s147
      %p151 = scmp.eq.s32.totalorder %s25, 0
      %p152 = por %p150, %p151
      %p153 = scmp.ne.s32.totalorder %s145, %s147
      %p154 = scmp.eq.s32.totalorder %s30, 1
      %p155 = por %p153, %p154
      %p156 = scmp.ne.s32.totalorder %s147, %s148
      %p157 = scmp.eq.s32.totalorder %s30, 0
      %p158 = por %p156, %p157
      %p159 = scmp.ne.s32.totalorder %s147, %s148
      %p160 = scmp.eq.s32.totalorder %s31, 1
      %p161 = por %p159, %p160
      %p163 = scmp.ne.s32.totalorder %s148, %s162
      %p164 = scmp.eq.s32.totalorder %s31, 0
      %p165 = por %p163, %p164
      %s167 = sadd.s32 %s166, 1
      %p170 = scmp.eq.s32.totalorder %s25, 1
      %p171 = scmp.ne.s32.totalorder %s166, %s168
      %p172 = scmp.eq.s32.totalorder %s25, 0
      %p173 = por %p171, %p172
      %p174 = scmp.ne.s32.totalorder %s166, %s168
      %p175 = scmp.eq.s32.totalorder %s30, 1
      %p176 = por %p174, %p175
      %p177 = scmp.ne.s32.totalorder %s168, %s169
      %p178 = scmp.eq.s32.totalorder %s30, 0
      %p179 = por %p177, %p178
      %p180 = scmp.ne.s32.totalorder %s168, %s169
      %p181 = scmp.eq.s32.totalorder %s31, 1
      %p182 = por %p180, %p181
      %p184 = scmp.ne.s32.totalorder %s169, %s183
      %p185 = scmp.eq.s32.totalorder %s31, 0
      %p186 = por %p184, %p185
      %s188 = sadd.s32 %s187, 1
      %p191 = scmp.eq.s32.totalorder %s25, 1
      %p192 = scmp.ne.s32.totalorder %s187, %s189
      %p193 = scmp.eq.s32.totalorder %s25, 0
      %p194 = por %p192, %p193
      %p195 = scmp.ne.s32.totalorder %s187, %s189
      %p196 = scmp.eq.s32.totalorder %s30, 1
      %p197 = por %p195, %p196
      %p198 = scmp.ne.s32.totalorder %s189, %s190
      %p199 = scmp.eq.s32.totalorder %s30, 0
      %p200 = por %p198, %p199
      %p201 = scmp.ne.s32.totalorder %s189, %s190
      %p202 = scmp.eq.s32.totalorder %s31, 1
      %p203 = por %p201, %p202
      %p205 = scmp.ne.s32.totalorder %s190, %s204
      %p206 = scmp.eq.s32.totalorder %s31, 0
      %p207 = por %p205, %p206
      %s209 = sadd.s32 %s208, 1
      %p212 = scmp.eq.s32.totalorder %s25, 1
      %p213 = scmp.ne.s32.totalorder %s208, %s210
      %p214 = scmp.eq.s32.totalorder %s25, 0
      %p215 = por %p213, %p214
      %p216 = scmp.ne.s32.totalorder %s208, %s210
      %p217 = scmp.eq.s32.totalorder %s30, 1
      %p218 = por %p216, %p217
      %p219 = scmp.ne.s32.totalorder %s210, %s211
      %p220 = scmp.eq.s32.totalorder %s30, 0
      %p221 = por %p219, %p220
      %p222 = scmp.ne.s32.totalorder %s210, %s211
      %p223 = scmp.eq.s32.totalorder %s31, 1
      %p224 = por %p222, %p223
      %p226 = scmp.ne.s32.totalorder %s211, %s225
      %p227 = scmp.eq.s32.totalorder %s31, 0
      %p228 = por %p226, %p227
      %s230 = sadd.s32 %s229, 1
      %p233 = scmp.eq.s32.totalorder %s25, 1
      %p234 = scmp.ne.s32.totalorder %s229, %s231
      %p235 = scmp.eq.s32.totalorder %s25, 0
      %p236 = por %p234, %p235
      %p237 = scmp.ne.s32.totalorder %s229, %s231
      %p238 = scmp.eq.s32.totalorder %s30, 1
      %p239 = por %p237, %p238
      %p240 = scmp.ne.s32.totalorder %s231, %s232
      %p241 = scmp.eq.s32.totalorder %s30, 0
      %p242 = por %p240, %p241
      %p243 = scmp.ne.s32.totalorder %s231, %s232
      %p244 = scmp.eq.s32.totalorder %s31, 1
      %p245 = por %p243, %p244
      %p247 = scmp.ne.s32.totalorder %s232, %s246
      %p248 = scmp.eq.s32.totalorder %s31, 0
      %p249 = por %p247, %p248
      %s251 = sadd.s32 %s250, 1
      %p254 = scmp.eq.s32.totalorder %s25, 1
      %p255 = scmp.ne.s32.totalorder %s250, %s252
      %p256 = scmp.eq.s32.totalorder %s25, 0
      %p257 = por %p255, %p256
      %p258 = scmp.ne.s32.totalorder %s250, %s252
      %p259 = scmp.eq.s32.totalorder %s30, 1
      %p260 = por %p258, %p259
      %p261 = scmp.ne.s32.totalorder %s252, %s253
      %p262 = scmp.eq.s32.totalorder %s30, 0
      %p263 = por %p261, %p262
      %p264 = scmp.ne.s32.totalorder %s252, %s253
      %p265 = scmp.eq.s32.totalorder %s31, 1
      %p266 = por %p264, %p265
      %p268 = scmp.ne.s32.totalorder %s253, %s267
      %p269 = scmp.eq.s32.totalorder %s31, 0
      %p270 = por %p268, %p269
      %s272 = sadd.s32 %s271, 1
      %p275 = scmp.eq.s32.totalorder %s25, 1
      %p276 = scmp.ne.s32.totalorder %s271, %s273
      %p277 = scmp.eq.s32.totalorder %s25, 0
      %p278 = por %p276, %p277
      %p279 = scmp.ne.s32.totalorder %s271, %s273
      %p280 = scmp.eq.s32.totalorder %s30, 1
      %p281 = por %p279, %p280
      %p282 = scmp.ne.s32.totalorder %s273, %s274
      %p283 = scmp.eq.s32.totalorder %s30, 0
      %p284 = por %p282, %p283
      %p285 = scmp.ne.s32.totalorder %s273, %s274
      %p286 = scmp.eq.s32.totalorder %s31, 1
      %p287 = por %p285, %p286
      %p289 = scmp.ne.s32.totalorder %s274, %s288
      %p290 = scmp.eq.s32.totalorder %s31, 0
      %p291 = por %p289, %p290
      %s293 = sadd.s32 %s292, 1
      %p296 = scmp.eq.s32.totalorder %s25, 1
      %p297 = scmp.ne.s32.totalorder %s292, %s294
      %p298 = scmp.eq.s32.totalorder %s25, 0
      %p299 = por %p297, %p298
      %p300 = scmp.ne.s32.totalorder %s292, %s294
      %p301 = scmp.eq.s32.totalorder %s30, 1
      %p302 = por %p300, %p301
      %p303 = scmp.ne.s32.totalorder %s294, %s295
      %p304 = scmp.eq.s32.totalorder %s30, 0
      %p305 = por %p303, %p304
      %p306 = scmp.ne.s32.totalorder %s294, %s295
      %p307 = scmp.eq.s32.totalorder %s31, 1
      %p308 = por %p306, %p307
      %p310 = scmp.ne.s32.totalorder %s295, %s309
      %p311 = scmp.eq.s32.totalorder %s31, 0
      %p312 = por %p310, %p311
      %s314 = sadd.s32 %s313, 1
      %p317 = scmp.eq.s32.totalorder %s25, 1
      %p318 = scmp.ne.s32.totalorder %s313, %s315
      %p319 = scmp.eq.s32.totalorder %s25, 0
      %p320 = por %p318, %p319
      %p321 = scmp.ne.s32.totalorder %s313, %s315
      %p322 = scmp.eq.s32.totalorder %s30, 1
      %p323 = por %p321, %p322
      %p324 = scmp.ne.s32.totalorder %s315, %s316
      %p325 = scmp.eq.s32.totalorder %s30, 0
      %p326 = por %p324, %p325
      %p327 = scmp.ne.s32.totalorder %s315, %s316
      %p328 = scmp.eq.s32.totalorder %s31, 1
      %p329 = por %p327, %p328
      %p331 = scmp.ne.s32.totalorder %s316, %s330
      %p332 = scmp.eq.s32.totalorder %s31, 0
      %p333 = por %p331, %p332
      %s335 = sadd.s32 %s334, 1
      %p338 = scmp.eq.s32.totalorder %s25, 1
      %p339 = scmp.ne.s32.totalorder %s334, %s336
      %p340 = scmp.eq.s32.totalorder %s25, 0
      %p341 = por %p339, %p340
      %p342 = scmp.ne.s32.totalorder %s334, %s336
      %p343 = scmp.eq.s32.totalorder %s30, 1
      %p344 = por %p342, %p343
      %p345 = scmp.ne.s32.totalorder %s336, %s337
      %p346 = scmp.eq.s32.totalorder %s30, 0
      %p347 = por %p345, %p346
      %p348 = scmp.ne.s32.totalorder %s336, %s337
      %p349 = scmp.eq.s32.totalorder %s31, 1
      %p350 = por %p348, %p349
      %p352 = scmp.ne.s32.totalorder %s337, %s351
      %p353 = scmp.eq.s32.totalorder %s31, 0
      %p354 = por %p352, %p353
      %s356 = sadd.s32 %s355, 1
      %p359 = scmp.eq.s32.totalorder %s25, 1
      %p360 = scmp.ne.s32.totalorder %s355, %s357
      %p361 = scmp.eq.s32.totalorder %s25, 0
      %p362 = por %p360, %p361
      %p363 = scmp.ne.s32.totalorder %s355, %s357
      %p364 = scmp.eq.s32.totalorder %s30, 1
      %p365 = por %p363, %p364
      %p366 = scmp.ne.s32.totalorder %s357, %s358
      %p367 = scmp.eq.s32.totalorder %s30, 0
      %p368 = por %p366, %p367
      %p369 = scmp.ne.s32.totalorder %s357, %s358
      %p370 = scmp.eq.s32.totalorder %s31, 1
      %p371 = por %p369, %p370
      %p373 = scmp.ne.s32.totalorder %s358, %s372
      %p374 = scmp.eq.s32.totalorder %s31, 0
      %p375 = por %p373, %p374
      %s377 = sadd.s32 %s376, 1
      %p380 = scmp.eq.s32.totalorder %s25, 1
      %p381 = scmp.ne.s32.totalorder %s376, %s378
      %p382 = scmp.eq.s32.totalorder %s25, 0
      %p383 = por %p381, %p382
      %p384 = scmp.ne.s32.totalorder %s376, %s378
      %p385 = scmp.eq.s32.totalorder %s30, 1
      %p386 = por %p384, %p385
      %p387 = scmp.ne.s32.totalorder %s378, %s379
      %p388 = scmp.eq.s32.totalorder %s30, 0
      %p389 = por %p387, %p388
      %p390 = scmp.ne.s32.totalorder %s378, %s379
      %p391 = scmp.eq.s32.totalorder %s31, 1
      %p392 = por %p390, %p391
      %p394 = scmp.ne.s32.totalorder %s379, %s393
      %p395 = scmp.eq.s32.totalorder %s31, 0
      %p396 = por %p394, %p395
      %s397 = ssub.s32 %s32, %s44
      %s398 = ssub.s32 %s33, %s40
      %s399 = sor.u32 %s397, %s398
      %p400 = scmp.eq.s32.totalorder %s399, 0
      %s402 = sadd.s32 %s401, 1
      %s403 = scalar_select %p400, %s401, %s402
      %p406 = pneg %p400
      %p407 = scmp.eq.s32.totalorder %s25, 1
      %p408 = por %p406, %p407
      %p409 = scmp.ne.s32.totalorder %s401, %s404
      %p410 = scmp.eq.s32.totalorder %s25, 0
      %p411 = por %p409, %p410
      %p412 = scmp.ne.s32.totalorder %s401, %s404
      %p413 = scmp.eq.s32.totalorder %s30, 1
      %p414 = por %p412, %p413
      %p415 = scmp.ne.s32.totalorder %s404, %s405
      %p416 = scmp.eq.s32.totalorder %s30, 0
      %p417 = por %p415, %p416
      %p418 = scmp.ne.s32.totalorder %s404, %s405
      %p419 = scmp.eq.s32.totalorder %s31, 1
      %p420 = por %p418, %p419
      %p422 = scmp.ne.s32.totalorder %s405, %s421
      %p423 = scmp.eq.s32.totalorder %s31, 0
      %p424 = por %p422, %p423
      %p425 = scmp.le.s32.totalorder 1, %s25
      %p426 = scmp.lt.s32.totalorder %s25, 3
      %p427 = pnand %p425, %p426
      %p428 = pneg %p427
      // Predicated region
      $region9: #{tpu_custom_call.1} parent=5 // pred_check
        _
      $region10: #{tpu_custom_call.1} parent=5 // pred_check_branch
        %430 = sbr.rel (%p427) target = $region12
      $region11: #{tpu_custom_call.1} parent=5 // pred_region
        %s431 = ssub.s32 %s25, 1
        // Predicated region
        $region13: #{tpu_custom_call.1} parent=11 // pred_check
          %p432 = pneg %p116
        $region14: #{tpu_custom_call.1} parent=11 // pred_check_branch
          %434 = sbr.rel (%p432) target = $region16
        $region15: #{tpu_custom_call.1} parent=11 // pred_region
          _
        $region16: #{tpu_custom_call.1} parent=11 // pred_fallthru
          _
        // Predicated region
        $region17: #{tpu_custom_call.1} parent=11 // pred_check
          %p435 = pneg %p137
        $region18: #{tpu_custom_call.1} parent=11 // pred_check_branch
          %437 = sbr.rel (%p435) target = $region20
        $region19: #{tpu_custom_call.1} parent=11 // pred_region
          _
        $region20: #{tpu_custom_call.1} parent=11 // pred_fallthru
          _
        // Predicated region
        $region21: #{tpu_custom_call.1} parent=11 // pred_check
          %p438 = pneg %p158
        $region22: #{tpu_custom_call.1} parent=11 // pred_check_branch
          %440 = sbr.rel (%p438) target = $region24
        $region23: #{tpu_custom_call.1} parent=11 // pred_region
          _
        $region24: #{tpu_custom_call.1} parent=11 // pred_fallthru
          _
        // Predicated region
        $region25: #{tpu_custom_call.1} parent=11 // pred_check
          %p441 = pneg %p179
        $region26: #{tpu_custom_call.1} parent=11 // pred_check_branch
          %443 = sbr.rel (%p441) target = $region28
        $region27: #{tpu_custom_call.1} parent=11 // pred_region
          _
        $region28: #{tpu_custom_call.1} parent=11 // pred_fallthru
          _
        // Predicated region
        $region29: #{tpu_custom_call.1} parent=11 // pred_check
          %p444 = pneg %p200
        $region30: #{tpu_custom_call.1} parent=11 // pred_check_branch
          %446 = sbr.rel (%p444) target = $region32
        $region31: #{tpu_custom_call.1} parent=11 // pred_region
          _
        $region32: #{tpu_custom_call.1} parent=11 // pred_fallthru
          _
        // Predicated region
        $region33: #{tpu_custom_call.1} parent=11 // pred_check
          %p447 = pneg %p221
        $region34: #{tpu_custom_call.1} parent=11 // pred_check_branch
          %449 = sbr.rel (%p447) target = $region36
        $region35: #{tpu_custom_call.1} parent=11 // pred_region
          _
        $region36: #{tpu_custom_call.1} parent=11 // pred_fallthru
          _
        // Predicated region
        $region37: #{tpu_custom_call.1} parent=11 // pred_check
          %p450 = pneg %p242
        $region38: #{tpu_custom_call.1} parent=11 // pred_check_branch
          %452 = sbr.rel (%p450) target = $region40
        $region39: #{tpu_custom_call.1} parent=11 // pred_region
          _
        $region40: #{tpu_custom_call.1} parent=11 // pred_fallthru
          _
        // Predicated region
        $region41: #{tpu_custom_call.1} parent=11 // pred_check
          %p453 = pneg %p263
        $region42: #{tpu_custom_call.1} parent=11 // pred_check_branch
          %455 = sbr.rel (%p453) target = $region44
        $region43: #{tpu_custom_call.1} parent=11 // pred_region
          _
        $region44: #{tpu_custom_call.1} parent=11 // pred_fallthru
          _
        // Predicated region
        $region45: #{tpu_custom_call.1} parent=11 // pred_check
          %p456 = pneg %p284
        $region46: #{tpu_custom_call.1} parent=11 // pred_check_branch
          %458 = sbr.rel (%p456) target = $region48
        $region47: #{tpu_custom_call.1} parent=11 // pred_region
          _
        $region48: #{tpu_custom_call.1} parent=11 // pred_fallthru
          _
        // Predicated region
        $region49: #{tpu_custom_call.1} parent=11 // pred_check
          %p459 = pneg %p305
        $region50: #{tpu_custom_call.1} parent=11 // pred_check_branch
          %461 = sbr.rel (%p459) target = $region52
        $region51: #{tpu_custom_call.1} parent=11 // pred_region
          _
        $region52: #{tpu_custom_call.1} parent=11 // pred_fallthru
          _
        // Predicated region
        $region53: #{tpu_custom_call.1} parent=11 // pred_check
          %p462 = pneg %p326
        $region54: #{tpu_custom_call.1} parent=11 // pred_check_branch
          %464 = sbr.rel (%p462) target = $region56
        $region55: #{tpu_custom_call.1} parent=11 // pred_region
          _
        $region56: #{tpu_custom_call.1} parent=11 // pred_fallthru
          _
        // Predicated region
        $region57: #{tpu_custom_call.1} parent=11 // pred_check
          %p465 = pneg %p347
        $region58: #{tpu_custom_call.1} parent=11 // pred_check_branch
          %467 = sbr.rel (%p465) target = $region60
        $region59: #{tpu_custom_call.1} parent=11 // pred_region
          _
        $region60: #{tpu_custom_call.1} parent=11 // pred_fallthru
          _
        // Predicated region
        $region61: #{tpu_custom_call.1} parent=11 // pred_check
          %p468 = pneg %p368
        $region62: #{tpu_custom_call.1} parent=11 // pred_check_branch
          %470 = sbr.rel (%p468) target = $region64
        $region63: #{tpu_custom_call.1} parent=11 // pred_region
          _
        $region64: #{tpu_custom_call.1} parent=11 // pred_fallthru
          _
        // Predicated region
        $region65: #{tpu_custom_call.1} parent=11 // pred_check
          %p471 = pneg %p389
        $region66: #{tpu_custom_call.1} parent=11 // pred_check_branch
          %473 = sbr.rel (%p471) target = $region68
        $region67: #{tpu_custom_call.1} parent=11 // pred_region
          _
        $region68: #{tpu_custom_call.1} parent=11 // pred_fallthru
          _
      $region12: #{tpu_custom_call.1} parent=5 // pred_fallthru
        _
      %p474 = scmp.lt.s32.totalorder %s25, 2
      // Predicated region
      $region69: #{tpu_custom_call.1} parent=5 // pred_check
        %p475 = pneg %p474
      $region70: #{tpu_custom_call.1} parent=5 // pred_check_branch
        %477 = sbr.rel (%p475) target = $region72
      $region71: #{tpu_custom_call.1} parent=5 // pred_region
        // Predicated region
        $region73: #{tpu_custom_call.1} parent=71 // pred_check
          %p478 = pneg %p59
        $region74: #{tpu_custom_call.1} parent=71 // pred_check_branch
          %480 = sbr.rel (%p478) target = $region76
        $region75: #{tpu_custom_call.1} parent=71 // pred_region
          %s481 = sand.u32 %s49, 1
          %s482 = sand.u32 %s49, 1
          %s483 = smul.addr %s482, 32
          %s484 = scalar_lea.vmem [#allocation3], %s483
          %s485 = smul.addr %s32, 8
          %s486 = sadd.s32 %s33, %s485
          %s487 = smul.addr %s486, 8
          %s488 = scalar_lea.vmem %s0, %s487
          // Predicated region
          $region77: #{tpu_custom_call.1} parent=75 // pred_check
            _
          $region78: #{tpu_custom_call.1} parent=75 // pred_check_branch
            %490 = sbr.rel (0) target = $region80
          $region79: #{tpu_custom_call.1} parent=75 // pred_region
            // Predicated region
            $region81: #{tpu_custom_call.1} parent=79 // pred_check
              _
            $region82: #{tpu_custom_call.1} parent=79 // pred_check_branch
              %492 = sbr.rel (0) target = $region84
            $region83: #{tpu_custom_call.1} parent=79 // pred_region
              // Predicated region
              $region96: #{tpu_custom_call.1} parent=83 // pred_check
                _
              $region97: #{tpu_custom_call.1} parent=83 // pred_check_branch
                %513 = sbr.rel (0) target = $region99
              $region98: #{tpu_custom_call.1} parent=83 // pred_region
                loop: start=0, step=1, limit=1
                $region100: #{tpu_custom_call.1} parent=98 // loop_pre_header
                  _
                $region101: #{tpu_custom_call.1} parent=98 // loop_header
                  %s515 = sphi 0, %s519
                  %p516 = scmp.ge.s32.totalorder %s515, 1
                  %s520 = sphi %s488, %s488
                  %s521 = sphi %s484, %s484
                $region102: #{tpu_custom_call.1} parent=98 // loop_header_branch
                  %518 = sbr.rel (%p516) target = $region106
                $region103: #{tpu_custom_call.1} parent=98 // loop_body
                  %v522 = vld [vmem:[%s520] sm:$0xff]
                  %523 = vst [vmem:[%s521] sm:$0xff] %v522
                  %v524 = vld [vmem:[%s520 + $0x10] sm:$0xff]
                  %525 = vst [vmem:[%s521 + $0x8] sm:$0xff] %v524
                  %v526 = vld [vmem:[%s520 + $0x20] sm:$0xff]
                  %527 = vst [vmem:[%s521 + $0x10] sm:$0xff] %v526
                  %v528 = vld [vmem:[%s520 + $0x30] sm:$0xff]
                  %529 = vst [vmem:[%s521 + $0x18] sm:$0xff] %v528
                $region104: #{tpu_custom_call.1} parent=98 // loop_footer
                  %s519 = sadd.s32 1, %s515
                $region105: #{tpu_custom_call.1} parent=98 // loop_footer_branch
                  %514 = sbr.rel target = $region101
                $region106: #{tpu_custom_call.1} parent=98 // loop_exit
                  _
              $region99: #{tpu_custom_call.1} parent=83 // pred_fallthru
                _
              // Predicated region
              $region107: #{tpu_custom_call.1} parent=83 // pred_check
                _
              $region108: #{tpu_custom_call.1} parent=83 // pred_check_branch
                %531 = sbr.rel target = $region110
              $region109: #{tpu_custom_call.1} parent=83 // pred_region
                _
              $region110: #{tpu_custom_call.1} parent=83 // pred_fallthru
                _
            $region84: #{tpu_custom_call.1} parent=79 // pred_fallthru
              _
            // Predicated region
            $region85: #{tpu_custom_call.1} parent=79 // pred_check
              _
            $region86: #{tpu_custom_call.1} parent=79 // pred_check_branch
              %494 = sbr.rel target = $region88
            $region87: #{tpu_custom_call.1} parent=79 // pred_region
              loop: start=0, step=1, limit=1
              $region89: #{tpu_custom_call.1} parent=87 // loop_pre_header
                _
              $region90: #{tpu_custom_call.1} parent=87 // loop_header
                %s497 = sphi 0, %s501
                %p498 = scmp.ge.s32.totalorder %s497, 1
                %s502 = sphi %s488, %s488
                %s503 = sphi %s484, %s484
              $region91: #{tpu_custom_call.1} parent=87 // loop_header_branch
                %500 = sbr.rel (%p498) target = $region95
              $region92: #{tpu_custom_call.1} parent=87 // loop_body
                %v504 = vld [vmem:[%s502] sm:$0xff]
                %505 = vst [vmem:[%s503] sm:$0xff] %v504
                %v506 = vld [vmem:[%s502 + $0x10] sm:$0xff]
                %507 = vst [vmem:[%s503 + $0x8] sm:$0xff] %v506
                %v508 = vld [vmem:[%s502 + $0x20] sm:$0xff]
                %509 = vst [vmem:[%s503 + $0x10] sm:$0xff] %v508
                %v510 = vld [vmem:[%s502 + $0x30] sm:$0xff]
                %511 = vst [vmem:[%s503 + $0x18] sm:$0xff] %v510
              $region93: #{tpu_custom_call.1} parent=87 // loop_footer
                %s501 = sadd.s32 1, %s497
              $region94: #{tpu_custom_call.1} parent=87 // loop_footer_branch
                %496 = sbr.rel target = $region90
              $region95: #{tpu_custom_call.1} parent=87 // loop_exit
                _
            $region88: #{tpu_custom_call.1} parent=79 // pred_fallthru
              _
          $region80: #{tpu_custom_call.1} parent=75 // pred_fallthru
            _
          %532 = vnop
        $region76: #{tpu_custom_call.1} parent=71 // pred_fallthru
          _
        // Predicated region
        $region111: #{tpu_custom_call.1} parent=71 // pred_check
          %p533 = pneg %p89
        $region112: #{tpu_custom_call.1} parent=71 // pred_check_branch
          %535 = sbr.rel (%p533) target = $region114
        $region113: #{tpu_custom_call.1} parent=71 // pred_region
          %s536 = sand.u32 %s79, 1
          %s537 = sand.u32 %s79, 1
          %s538 = smul.addr %s537, 32
          %s539 = scalar_lea.vmem [#allocation4], %s538
          %s540 = sadd.s32 %s33, 1
          %s541 = smul.addr %s32, 8
          %s542 = sadd.s32 %s540, %s541
          %s543 = smul.addr %s542, 8
          %s544 = scalar_lea.vmem %s1, %s543
          // Predicated region
          $region115: #{tpu_custom_call.1} parent=113 // pred_check
            _
          $region116: #{tpu_custom_call.1} parent=113 // pred_check_branch
            %546 = sbr.rel (0) target = $region118
          $region117: #{tpu_custom_call.1} parent=113 // pred_region
            // Predicated region
            $region119: #{tpu_custom_call.1} parent=117 // pred_check
              _
            $region120: #{tpu_custom_call.1} parent=117 // pred_check_branch
              %548 = sbr.rel (0) target = $region122
            $region121: #{tpu_custom_call.1} parent=117 // pred_region
              // Predicated region
              $region134: #{tpu_custom_call.1} parent=121 // pred_check
                _
              $region135: #{tpu_custom_call.1} parent=121 // pred_check_branch
                %569 = sbr.rel (0) target = $region137
              $region136: #{tpu_custom_call.1} parent=121 // pred_region
                loop: start=0, step=1, limit=1
                $region138: #{tpu_custom_call.1} parent=136 // loop_pre_header
                  _
                $region139: #{tpu_custom_call.1} parent=136 // loop_header
                  %s571 = sphi 0, %s575
                  %p572 = scmp.ge.s32.totalorder %s571, 1
                  %s576 = sphi %s544, %s544
                  %s577 = sphi %s539, %s539
                $region140: #{tpu_custom_call.1} parent=136 // loop_header_branch
                  %574 = sbr.rel (%p572) target = $region144
                $region141: #{tpu_custom_call.1} parent=136 // loop_body
                  %v578 = vld [vmem:[%s576] sm:$0xff]
                  %579 = vst [vmem:[%s577] sm:$0xff] %v578
                  %v580 = vld [vmem:[%s576 + $0x10] sm:$0xff]
                  %581 = vst [vmem:[%s577 + $0x8] sm:$0xff] %v580
                  %v582 = vld [vmem:[%s576 + $0x20] sm:$0xff]
                  %583 = vst [vmem:[%s577 + $0x10] sm:$0xff] %v582
                  %v584 = vld [vmem:[%s576 + $0x30] sm:$0xff]
                  %585 = vst [vmem:[%s577 + $0x18] sm:$0xff] %v584
                $region142: #{tpu_custom_call.1} parent=136 // loop_footer
                  %s575 = sadd.s32 1, %s571
                $region143: #{tpu_custom_call.1} parent=136 // loop_footer_branch
                  %570 = sbr.rel target = $region139
                $region144: #{tpu_custom_call.1} parent=136 // loop_exit
                  _
              $region137: #{tpu_custom_call.1} parent=121 // pred_fallthru
                _
              // Predicated region
              $region145: #{tpu_custom_call.1} parent=121 // pred_check
                _
              $region146: #{tpu_custom_call.1} parent=121 // pred_check_branch
                %587 = sbr.rel target = $region148
              $region147: #{tpu_custom_call.1} parent=121 // pred_region
                _
              $region148: #{tpu_custom_call.1} parent=121 // pred_fallthru
                _
            $region122: #{tpu_custom_call.1} parent=117 // pred_fallthru
              _
            // Predicated region
            $region123: #{tpu_custom_call.1} parent=117 // pred_check
              _
            $region124: #{tpu_custom_call.1} parent=117 // pred_check_branch
              %550 = sbr.rel target = $region126
            $region125: #{tpu_custom_call.1} parent=117 // pred_region
              loop: start=0, step=1, limit=1
              $region127: #{tpu_custom_call.1} parent=125 // loop_pre_header
                _
              $region128: #{tpu_custom_call.1} parent=125 // loop_header
                %s553 = sphi 0, %s557
                %p554 = scmp.ge.s32.totalorder %s553, 1
                %s558 = sphi %s544, %s544
                %s559 = sphi %s539, %s539
              $region129: #{tpu_custom_call.1} parent=125 // loop_header_branch
                %556 = sbr.rel (%p554) target = $region133
              $region130: #{tpu_custom_call.1} parent=125 // loop_body
                %v560 = vld [vmem:[%s558] sm:$0xff]
                %561 = vst [vmem:[%s559] sm:$0xff] %v560
                %v562 = vld [vmem:[%s558 + $0x10] sm:$0xff]
                %563 = vst [vmem:[%s559 + $0x8] sm:$0xff] %v562
                %v564 = vld [vmem:[%s558 + $0x20] sm:$0xff]
                %565 = vst [vmem:[%s559 + $0x10] sm:$0xff] %v564
                %v566 = vld [vmem:[%s558 + $0x30] sm:$0xff]
                %567 = vst [vmem:[%s559 + $0x18] sm:$0xff] %v566
              $region131: #{tpu_custom_call.1} parent=125 // loop_footer
                %s557 = sadd.s32 1, %s553
              $region132: #{tpu_custom_call.1} parent=125 // loop_footer_branch
                %552 = sbr.rel target = $region128
              $region133: #{tpu_custom_call.1} parent=125 // loop_exit
                _
            $region126: #{tpu_custom_call.1} parent=117 // pred_fallthru
              _
          $region118: #{tpu_custom_call.1} parent=113 // pred_fallthru
            _
          %588 = vnop
        $region114: #{tpu_custom_call.1} parent=71 // pred_fallthru
          _
      $region72: #{tpu_custom_call.1} parent=5 // pred_fallthru
        _
      %p589 = scmp.le.s32.totalorder 1, %s25
      %p590 = scmp.lt.s32.totalorder %s25, 3
      %p591 = pnand %p589, %p590
      %p592 = pneg %p591
      // Predicated region
      $region149: #{tpu_custom_call.1} parent=5 // pred_check
        _
      $region150: #{tpu_custom_call.1} parent=5 // pred_check_branch
        %594 = sbr.rel (%p591) target = $region152
      $region151: #{tpu_custom_call.1} parent=5 // pred_region
        %s595 = ssub.s32 %s25, 1
        %s596 = sand.u32 %s52, 1
        %s597 = sand.u32 %s52, 1
        %s598 = smul.addr %s597, 32
        %s599 = scalar_lea.vmem [#allocation3], %s598
        // Predicated region
        $region153: #{tpu_custom_call.1} parent=151 // pred_check
          %p600 = pneg %p65
        $region154: #{tpu_custom_call.1} parent=151 // pred_check_branch
          %602 = sbr.rel (%p600) target = $region156
        $region155: #{tpu_custom_call.1} parent=151 // pred_region
          _
        $region156: #{tpu_custom_call.1} parent=151 // pred_fallthru
          _
        %s603 = sand.u32 %s82, 1
        %s604 = sand.u32 %s82, 1
        %s605 = smul.addr %s604, 32
        %s606 = scalar_lea.vmem [#allocation4], %s605
        // Predicated region
        $region157: #{tpu_custom_call.1} parent=151 // pred_check
          %p607 = pneg %p95
        $region158: #{tpu_custom_call.1} parent=151 // pred_check_branch
          %609 = sbr.rel (%p607) target = $region160
        $region159: #{tpu_custom_call.1} parent=151 // pred_region
          _
        $region160: #{tpu_custom_call.1} parent=151 // pred_fallthru
          _
        %s610 = sand.u32 %s52, 1
        %s611 = sand.u32 %s52, 1
        %s612 = smul.addr %s611, 32
        %s613 = scalar_lea.vmem [#allocation3], %s612
        %p614 = pneg %p65
        %p615 = pneg %p62
        %s616 = sand.u32 %s82, 1
        %s617 = sand.u32 %s82, 1
        %s618 = smul.addr %s617, 32
        %s619 = scalar_lea.vmem [#allocation4], %s618
        %p620 = pneg %p95
        %p621 = pneg %p92
        %p622 = pneg %p116
        %p623 = pneg %p113
        %p624 = pneg %p137
        %p625 = pneg %p134
        %p626 = pneg %p158
        %p627 = pneg %p155
        %p628 = pneg %p179
        %p629 = pneg %p176
        %p630 = pneg %p200
        %p631 = pneg %p197
        %p632 = pneg %p221
        %p633 = pneg %p218
        %p634 = pneg %p242
        %p635 = pneg %p239
        %p636 = pneg %p263
        %p637 = pneg %p260
        %p638 = pneg %p284
        %p639 = pneg %p281
        %p640 = pneg %p305
        %p641 = pneg %p302
        %p642 = pneg %p326
        %p643 = pneg %p323
        %p644 = pneg %p347
        %p645 = pneg %p344
        %p646 = pneg %p368
        %p647 = pneg %p365
        %p648 = pneg %p389
        %p649 = pneg %p386
        %p650 = pneg %p417
        %p651 = pneg %p414
        %s652 = sand.u32 %s404, 1
        %s653 = scalar_lea.sflag [#allocation6], %s652
        %s654 = sand.u32 %s404, 1
        %s655 = smul.addr %s654, 32
        %s656 = scalar_lea.vmem [#allocation5], %s655
        %s657 = sadd.s32 %s35, 1
        %v658 = vlaneseq
        %v659 = vand.u32 %v658, 127
        %v660 = vadd.s32 %v659, 128
        %s661 = smul.u32 %s35, 128
        %s662 = ssub.s32 %s661, 8
        %v663 = vstv %s662
        %v664 = vadd.s32 %v659, %v663
        %v665 = vadd.s32 %v660, %v663
        %vm666 = vcmp.ge.s32.totalorder %v664, 0
        %vm667 = vcmp.ge.s32.totalorder %v665, 0
        %vm668 = vcmp.lt.s32.totalorder %v664, 16
        %vm669 = vcmp.lt.s32.totalorder %v665, 16
        %vm670 = vmand %vm666, %vm668
        %vm671 = vmand %vm667, %vm669
        %v672 = vsel %vm670, 1, 0
        %v673 = vsel %vm671, 1, 0
        %v674 = vcvt.s32.f32 %v672
        %v675 = vcvt.s32.f32 %v673
        %v676 = vld [vmem:[%s599] sm:$0xff]
        %v677 = vld [vmem:[%s599 + $0x8] sm:$0xff]
        %v678 = vld [vmem:[%s599 + $0x10] sm:$0xff]
        %v679 = vld [vmem:[%s599 + $0x18] sm:$0xff]
        %v680 = vld [vmem:[%s606] sm:$0xff]
        %v681 = vld [vmem:[%s606 + $0x8] sm:$0xff]
        %v682 = vld [vmem:[%s606 + $0x10] sm:$0xff]
        %v683 = vld [vmem:[%s606 + $0x18] sm:$0xff]
        %684 = vst [vmem:[#allocation2] sm:$0xff] %v676
        %685 = vst [vmem:[#allocation2 + $0x8] sm:$0xff] %v680
        %686 = vst [vmem:[#allocation2 + $0x10] sm:$0xff] %v677
        %687 = vst [vmem:[#allocation2 + $0x18] sm:$0xff] %v681
        %688 = vst [vmem:[#allocation2 + $0x20] sm:$0xff] %v678
        %689 = vst [vmem:[#allocation2 + $0x28] sm:$0xff] %v682
        %690 = vst [vmem:[#allocation2 + $0x30] sm:$0xff] %v679
        %691 = vst [vmem:[#allocation2 + $0x38] sm:$0xff] %v683
        %v692 = vld [vmem:[%s2] sm:$0xff]
        %v693 = vld [vmem:[%s2 + $0x8] sm:$0xff]
        %v694 = vld [vmem:[%s2 + $0x10] sm:$0xff]
        %v695 = vld [vmem:[%s2 + $0x18] sm:$0xff]
        %v696 = vld [vmem:[%s2 + $0x20] sm:$0xff]
        %v697 = vld [vmem:[%s2 + $0x28] sm:$0xff]
        %vm698 = vcmask 261120
        %v700 = vsel %vm698, %v692, 0
        %v703 = vsel %vm698, %v693, 0
        %v706 = vsel %vm698, %v694, 0
        %v709 = vsel %vm698, %v695, 0
        %v712 = vsel %vm698, %v696, 0
        %v715 = vsel %vm698, %v697, 0
        %717 = vmatprep.subr.mxu0 %v680
        %718 = vmatpush1.msra.mxu0 %v676
        %719 = vmatprep.subr.mxu0 %v681
        %720 = vmatpush1.msra.mxu0 %v677
        %721 = vmatprep.subr.mxu0 %v682
        %722 = vmatpush1.msra.mxu0 %v678
        %723 = vmatprep.subr.mxu0 %v683
        %724 = vmatpush1.msra.mxu0 %v679
        %725 = vmatprep.subr.mxu0 0.0
        %726 = vmatpush1.msra.mxu0 0.0
        %727 = vmatprep.subr.mxu0 0.0
        %728 = vmatpush1.msra.mxu0 0.0
        %729 = vmatprep.subr.mxu0 0.0
        %730 = vmatpush1.msra.mxu0 0.0
        %731 = vmatprep.subr.mxu0 0.0
        %732 = vmatpush1.msra.mxu0 0.0
        %733 = vmatprep.subr.mxu0 0.0
        %734 = vmatpush1.msra.mxu0 0.0
        %735 = vmatprep.subr.mxu0 0.0
        %736 = vmatpush1.msra.mxu0 0.0
        %737 = vmatprep.subr.mxu0 0.0
        %738 = vmatpush1.msra.mxu0 0.0
        %739 = vmatprep.subr.mxu0 0.0
        %740 = vmatpush1.msra.mxu0 0.0
        %741 = vmatprep.subr.mxu0 0.0
        %742 = vmatpush1.msra.mxu0 0.0
        %743 = vmatprep.subr.mxu0 0.0
        %744 = vmatpush1.msra.mxu0 0.0
        %745 = vmatprep.subr.mxu0 0.0
        %746 = vmatpush1.msra.mxu0 0.0
        %747 = vmatprep.subr.mxu0 0.0
        %748 = vmatpush1.msra.mxu0 0.0
        %749 = vmatprep.subr.mxu0 0.0
        %750 = vmatpush1.msra.mxu0 0.0
        %751 = vmatprep.subr.mxu0 0.0
        %752 = vmatpush1.msra.mxu0 0.0
        %753 = vmatprep.subr.mxu0 0.0
        %754 = vmatpush1.msra.mxu0 0.0
        %755 = vmatprep.subr.mxu0 0.0
        %756 = vmatpush1.msra.mxu0 0.0
        %757 = vmatprep.subr.mxu0 0.0
        %758 = vmatpush1.msra.mxu0 0.0
        %759 = vmatprep.subr.mxu0 0.0
        %760 = vmatpush1.msra.mxu0 0.0
        %761 = vmatprep.subr.mxu0 0.0
        %762 = vmatpush1.msra.mxu0 0.0
        %763 = vmatprep.subr.mxu0 0.0
        %764 = vmatpush1.msra.mxu0 0.0
        %765 = vmatprep.subr.mxu0 0.0
        %766 = vmatpush1.msra.mxu0 0.0
        %767 = vmatprep.subr.mxu0 0.0
        %768 = vmatpush1.msra.mxu0 0.0
        %769 = vmatprep.subr.mxu0 0.0
        %770 = vmatpush1.msra.mxu0 0.0
        %771 = vmatprep.subr.mxu0 0.0
        %772 = vmatpush1.msra.mxu0 0.0
        %773 = vmatprep.subr.mxu0 0.0
        %774 = vmatpush1.msra.mxu0 0.0
        %775 = vmatprep.subr.mxu0 0.0
        %776 = vmatpush1.msra.mxu0 0.0
        %777 = vmatprep.subr.mxu0 0.0
        %778 = vmatpush1.msra.mxu0 0.0
        %779 = vmatprep.subr.mxu0 0.0
        %780 = vmatpush1.msra.mxu0 0.0
        %781 = vmatprep.mubr.f32.mxu0 0.0
        %782 = vmatmul.mubr.f32.gmra.mrb[0].mxu0 %v700
        %v783 = vpop.f32.mrb[0].mxu0
        %v784 = vadd.f32 0.0, %v783
        %v785 = vpop.f32.mrb[0].mxu0
        %v786 = vadd.f32 0.0, %v785
        %787 = vmatprep.mubr.f32.mxu0 0.0
        %788 = vmatmul.mubr.f32.gmra.mrb[0].mxu0 %v703
        %v789 = vpop.f32.mrb[0].mxu0
        %v790 = vadd.f32 0.0, %v789
        %v791 = vpop.f32.mrb[0].mxu0
        %v792 = vadd.f32 0.0, %v791
        %793 = vmatprep.mubr.f32.mxu0 0.0
        %794 = vmatmul.mubr.f32.gmra.mrb[0].mxu0 %v706
        %v795 = vpop.f32.mrb[0].mxu0
        %v796 = vadd.f32 0.0, %v795
        %v797 = vpop.f32.mrb[0].mxu0
        %v798 = vadd.f32 0.0, %v797
        %799 = vmatprep.mubr.f32.mxu0 0.0
        %800 = vmatmul.mubr.f32.gmra.mrb[0].mxu0 %v709
        %v801 = vpop.f32.mrb[0].mxu0
        %v802 = vadd.f32 0.0, %v801
        %v803 = vpop.f32.mrb[0].mxu0
        %v804 = vadd.f32 0.0, %v803
        %805 = vmatprep.mubr.f32.mxu0 0.0
        %806 = vmatmul.mubr.f32.gmra.mrb[0].mxu0 %v712
        %v807 = vpop.f32.mrb[0].mxu0
        %v808 = vadd.f32 0.0, %v807
        %v809 = vpop.f32.mrb[0].mxu0
        %v810 = vadd.f32 0.0, %v809
        %811 = vmatprep.mubr.f32.mxu0 0.0
        %812 = vmatmul.mubr.f32.gmra.mrb[0].mxu0 %v715
        %v813 = vpop.f32.mrb[0].mxu0
        %v814 = vadd.f32 0.0, %v813
        %v815 = vpop.f32.mrb[0].mxu0
        %v816 = vadd.f32 0.0, %v815
        %817 = vdwg.mxu0
        %v818 = vld [vmem:[%s3] sm:$0xff]
        %v819 = vld [vmem:[%s3 + $0x8] sm:$0xff]
        %821 = vset.pattern.permute.xlu0 0
        %822 = vperm.xlu0 %821, %v818
        %v823 = vpop.permute.xlu0 %822
        %826 = vset.pattern.permute.xlu0 0
        %827 = vperm.xlu0 %826, %v819
        %v828 = vpop.permute.xlu0 %827
        %v830 = vadd.f32 %v823, %v796
        %v831 = vadd.f32 %v823, %v798
        %v832 = vadd.f32 %v828, %v802
        %v833 = vadd.f32 %v828, %v804
        %834 = vrot.lane.b32.xlu0 %v784, 1
        %v835 = vpop.permute.xlu0 %834
        %836 = vrot.lane.b32.xlu0 %v790, 1
        %v837 = vpop.permute.xlu0 %836
        %838 = vrot.lane.b32.xlu0 %v786, 1
        %v839 = vpop.permute.xlu0 %838
        %840 = vrot.lane.b32.xlu0 %v792, 1
        %v841 = vpop.permute.xlu0 %840
        %vm842 = vcmp.lt.s32.totalorder %v659, 1
        %v843 = vsel %vm842, %v835, %v839
        %v844 = vsel %vm842, %v837, %v841
        %v845 = vsel %vm842, %v839, %v835
        %v846 = vsel %vm842, %v841, %v837
        %v847 = vadd.f32 %v830, %v845
        %v848 = vadd.f32 %v831, %v843
        %v849 = vadd.f32 %v832, %v846
        %v850 = vadd.f32 %v833, %v844
        %851 = vrot.lane.b32.xlu0 %v808, 127
        %v852 = vpop.permute.xlu0 %851
        %853 = vrot.lane.b32.xlu0 %v814, 127
        %v854 = vpop.permute.xlu0 %853
        %855 = vrot.lane.b32.xlu0 %v810, 127
        %v856 = vpop.permute.xlu0 %855
        %857 = vrot.lane.b32.xlu0 %v816, 127
        %v858 = vpop.permute.xlu0 %857
        %vm859 = vcmp.lt.s32.totalorder %v659, 127
        %v860 = vsel %vm859, %v852, %v856
        %v861 = vsel %vm859, %v854, %v858
        %v862 = vsel %vm859, %v856, %v852
        %v863 = vsel %vm859, %v858, %v854
        %v864 = vadd.f32 %v847, %v860
        %v865 = vadd.f32 %v848, %v862
        %v866 = vadd.f32 %v849, %v861
        %v867 = vadd.f32 %v850, %v863
        %v868 = vld [vmem:[%s4] sm:$0xff]
        %v869 = vld [vmem:[%s4 + $0x8] sm:$0xff]
        %v870 = vld [vmem:[%s4 + $0x10] sm:$0xff]
        %v871 = vld [vmem:[%s4 + $0x18] sm:$0xff]
        %v872 = vld [vmem:[%s4 + $0x20] sm:$0xff]
        %v873 = vld [vmem:[%s4 + $0x28] sm:$0xff]
        %v874 = vtanh.pop %v864
        %v875 = vtanh.pop %v865
        %v876 = vtanh.pop %v866
        %v877 = vtanh.pop %v867
        %v878 = vmul.f32 %v874, %v674
        %v879 = vmul.f32 %v875, %v675
        %v880 = vmul.f32 %v876, %v674
        %v881 = vmul.f32 %v877, %v675
        %882 = vst [vmem:[#allocation2 + $0x40] sm:$0xff] %v878
        %883 = vst [vmem:[#allocation2 + $0x48] sm:$0xff] %v879
        %884 = vst [vmem:[#allocation2 + $0x50] sm:$0xff] %v880
        %885 = vst [vmem:[#allocation2 + $0x58] sm:$0xff] %v881
        %v886 = vld [vmem:[%s5] sm:$0xff]
        %v887 = vld [vmem:[%s5 + $0x8] sm:$0xff]
        %v888 = vld [vmem:[%s5 + $0x10] sm:$0xff]
        %v889 = vld [vmem:[%s5 + $0x18] sm:$0xff]
        %v890 = vld [vmem:[%s5 + $0x20] sm:$0xff]
        %v891 = vld [vmem:[%s5 + $0x28] sm:$0xff]
        %vm892 = vcmask 130048
        %v894 = vsel %vm892, %v886, 0
        %v897 = vsel %vm892, %v887, 0
        %v900 = vsel %vm892, %v888, 0
        %v903 = vsel %vm892, %v889, 0
        %v906 = vsel %vm892, %v890, 0
        %v909 = vsel %vm892, %v891, 0
        %911 = vmatprep.subr.mxu0 %v879
        %912 = vmatpush1.msra.mxu0 %v878
        %913 = vmatprep.subr.mxu0 %v881
        %914 = vmatpush1.msra.mxu0 %v880
        %915 = vmatprep.subr.mxu0 0.0
        %916 = vmatpush1.msra.mxu0 0.0
        %917 = vmatprep.subr.mxu0 0.0
        %918 = vmatpush1.msra.mxu0 0.0
        %919 = vmatprep.subr.mxu0 0.0
        %920 = vmatpush1.msra.mxu0 0.0
        %921 = vmatprep.subr.mxu0 0.0
        %922 = vmatpush1.msra.mxu0 0.0
        %923 = vmatprep.subr.mxu0 0.0
        %924 = vmatpush1.msra.mxu0 0.0
        %925 = vmatprep.subr.mxu0 0.0
        %926 = vmatpush1.msra.mxu0 0.0
        %927 = vmatprep.subr.mxu0 0.0
        %928 = vmatpush1.msra.mxu0 0.0
        %929 = vmatprep.subr.mxu0 0.0
        %930 = vmatpush1.msra.mxu0 0.0
        %931 = vmatprep.subr.mxu0 0.0
        %932 = vmatpush1.msra.mxu0 0.0
        %933 = vmatprep.subr.mxu0 0.0
        %934 = vmatpush1.msra.mxu0 0.0
        %935 = vmatprep.subr.mxu0 0.0
        %936 = vmatpush1.msra.mxu0 0.0
        %937 = vmatprep.subr.mxu0 0.0
        %938 = vmatpush1.msra.mxu0 0.0
        %939 = vmatprep.subr.mxu0 0.0
        %940 = vmatpush1.msra.mxu0 0.0
        %941 = vmatprep.subr.mxu0 0.0
        %942 = vmatpush1.msra.mxu0 0.0
        %943 = vmatprep.subr.mxu0 0.0
        %944 = vmatpush1.msra.mxu0 0.0
        %945 = vmatprep.subr.mxu0 0.0
        %946 = vmatpush1.msra.mxu0 0.0
        %947 = vmatprep.subr.mxu0 0.0
        %948 = vmatpush1.msra.mxu0 0.0
        %949 = vmatprep.subr.mxu0 0.0
        %950 = vmatpush1.msra.mxu0 0.0
        %951 = vmatprep.subr.mxu0 0.0
        %952 = vmatpush1.msra.mxu0 0.0
        %953 = vmatprep.subr.mxu0 0.0
        %954 = vmatpush1.msra.mxu0 0.0
        %955 = vmatprep.subr.mxu0 0.0
        %956 = vmatpush1.msra.mxu0 0.0
        %957 = vmatprep.subr.mxu0 0.0
        %958 = vmatpush1.msra.mxu0 0.0
        %959 = vmatprep.subr.mxu0 0.0
        %960 = vmatpush1.msra.mxu0 0.0
        %961 = vmatprep.subr.mxu0 0.0
        %962 = vmatpush1.msra.mxu0 0.0
        %963 = vmatprep.subr.mxu0 0.0
        %964 = vmatpush1.msra.mxu0 0.0
        %965 = vmatprep.subr.mxu0 0.0
        %966 = vmatpush1.msra.mxu0 0.0
        %967 = vmatprep.subr.mxu0 0.0
        %968 = vmatpush1.msra.mxu0 0.0
        %969 = vmatprep.subr.mxu0 0.0
        %970 = vmatpush1.msra.mxu0 0.0
        %971 = vmatprep.subr.mxu0 0.0
        %972 = vmatpush1.msra.mxu0 0.0
        %973 = vmatprep.subr.mxu0 0.0
        %974 = vmatpush1.msra.mxu0 0.0
        %975 = vmatprep.mubr.f32.mxu0 0.0
        %976 = vmatmul.mubr.f32.gmra.mrb[0].mxu0 %v894
        %v977 = vpop.f32.mrb[0].mxu0
        %v978 = vadd.f32 0.0, %v977
        %v979 = vpop.f32.mrb[0].mxu0
        %v980 = vadd.f32 0.0, %v979
        %981 = vmatprep.mubr.f32.mxu0 0.0
        %982 = vmatmul.mubr.f32.gmra.mrb[0].mxu0 %v897
        %v983 = vpop.f32.mrb[0].mxu0
        %v984 = vadd.f32 0.0, %v983
        %v985 = vpop.f32.mrb[0].mxu0
        %v986 = vadd.f32 0.0, %v985
        %987 = vmatprep.mubr.f32.mxu0 0.0
        %988 = vmatmul.mubr.f32.gmra.mrb[0].mxu0 %v900
        %v989 = vpop.f32.mrb[0].mxu0
        %v990 = vadd.f32 0.0, %v989
        %v991 = vpop.f32.mrb[0].mxu0
        %v992 = vadd.f32 0.0, %v991
        %993 = vmatprep.mubr.f32.mxu0 0.0
        %994 = vmatmul.mubr.f32.gmra.mrb[0].mxu0 %v903
        %v995 = vpop.f32.mrb[0].mxu0
        %v996 = vadd.f32 0.0, %v995
        %v997 = vpop.f32.mrb[0].mxu0
        %v998 = vadd.f32 0.0, %v997
        %999 = vmatprep.mubr.f32.mxu0 0.0
        %1000 = vmatmul.mubr.f32.gmra.mrb[0].mxu0 %v906
        %v1001 = vpop.f32.mrb[0].mxu0
        %v1002 = vadd.f32 0.0, %v1001
        %v1003 = vpop.f32.mrb[0].mxu0
        %v1004 = vadd.f32 0.0, %v1003
        %1005 = vmatprep.mubr.f32.mxu0 0.0
        %1006 = vmatmul.mubr.f32.gmra.mrb[0].mxu0 %v909
        %v1007 = vpop.f32.mrb[0].mxu0
        %v1008 = vadd.f32 0.0, %v1007
        %v1009 = vpop.f32.mrb[0].mxu0
        %v1010 = vadd.f32 0.0, %v1009
        %1011 = vdwg.mxu0
        %v1013 = vsel %vm698, %v868, 0
        %v1016 = vsel %vm698, %v869, 0
        %v1019 = vsel %vm698, %v870, 0
        %v1022 = vsel %vm698, %v871, 0
        %v1025 = vsel %vm698, %v872, 0
        %v1028 = vsel %vm698, %v873, 0
        %1030 = vmatprep.subr.mxu0 %v680
        %1031 = vmatpush1.msra.mxu0 %v676
        %1032 = vmatprep.subr.mxu0 %v681
        %1033 = vmatpush1.msra.mxu0 %v677
        %1034 = vmatprep.subr.mxu0 %v682
        %1035 = vmatpush1.msra.mxu0 %v678
        %1036 = vmatprep.subr.mxu0 %v683
        %1037 = vmatpush1.msra.mxu0 %v679
        %1038 = vmatprep.subr.mxu0 0.0
        %1039 = vmatpush1.msra.mxu0 0.0
        %1040 = vmatprep.subr.mxu0 0.0
        %1041 = vmatpush1.msra.mxu0 0.0
        %1042 = vmatprep.subr.mxu0 0.0
        %1043 = vmatpush1.msra.mxu0 0.0
        %1044 = vmatprep.subr.mxu0 0.0
        %1045 = vmatpush1.msra.mxu0 0.0
        %1046 = vmatprep.subr.mxu0 0.0
        %1047 = vmatpush1.msra.mxu0 0.0
        %1048 = vmatprep.subr.mxu0 0.0
        %1049 = vmatpush1.msra.mxu0 0.0
        %1050 = vmatprep.subr.mxu0 0.0
        %1051 = vmatpush1.msra.mxu0 0.0
        %1052 = vmatprep.subr.mxu0 0.0
        %1053 = vmatpush1.msra.mxu0 0.0
        %1054 = vmatprep.subr.mxu0 0.0
        %1055 = vmatpush1.msra.mxu0 0.0
        %1056 = vmatprep.subr.mxu0 0.0
        %1057 = vmatpush1.msra.mxu0 0.0
        %1058 = vmatprep.subr.mxu0 0.0
        %1059 = vmatpush1.msra.mxu0 0.0
        %1060 = vmatprep.subr.mxu0 0.0
        %1061 = vmatpush1.msra.mxu0 0.0
        %1062 = vmatprep.subr.mxu0 0.0
        %1063 = vmatpush1.msra.mxu0 0.0
        %1064 = vmatprep.subr.mxu0 0.0
        %1065 = vmatpush1.msra.mxu0 0.0
        %1066 = vmatprep.subr.mxu0 0.0
        %1067 = vmatpush1.msra.mxu0 0.0
        %1068 = vmatprep.subr.mxu0 0.0
        %1069 = vmatpush1.msra.mxu0 0.0
        %1070 = vmatprep.subr.mxu0 0.0
        %1071 = vmatpush1.msra.mxu0 0.0
        %1072 = vmatprep.subr.mxu0 0.0
        %1073 = vmatpush1.msra.mxu0 0.0
        %1074 = vmatprep.subr.mxu0 0.0
        %1075 = vmatpush1.msra.mxu0 0.0
        %1076 = vmatprep.subr.mxu0 0.0
        %1077 = vmatpush1.msra.mxu0 0.0
        %1078 = vmatprep.subr.mxu0 0.0
        %1079 = vmatpush1.msra.mxu0 0.0
        %1080 = vmatprep.subr.mxu0 0.0
        %1081 = vmatpush1.msra.mxu0 0.0
        %1082 = vmatprep.subr.mxu0 0.0
        %1083 = vmatpush1.msra.mxu0 0.0
        %1084 = vmatprep.subr.mxu0 0.0
        %1085 = vmatpush1.msra.mxu0 0.0
        %1086 = vmatprep.subr.mxu0 0.0
        %1087 = vmatpush1.msra.mxu0 0.0
        %1088 = vmatprep.subr.mxu0 0.0
        %1089 = vmatpush1.msra.mxu0 0.0
        %1090 = vmatprep.subr.mxu0 0.0
        %1091 = vmatpush1.msra.mxu0 0.0
        %1092 = vmatprep.subr.mxu0 0.0
        %1093 = vmatpush1.msra.mxu0 0.0
        %1094 = vmatprep.mubr.f32.mxu0 0.0
        %1095 = vmatmul.mubr.f32.gmra.mrb[0].mxu0 %v1013
        %v1096 = vpop.f32.mrb[0].mxu0
        %v1097 = vadd.f32 %v978, %v1096
        %v1098 = vpop.f32.mrb[0].mxu0
        %v1099 = vadd.f32 %v980, %v1098
        %1100 = vmatprep.mubr.f32.mxu0 0.0
        %1101 = vmatmul.mubr.f32.gmra.mrb[0].mxu0 %v1016
        %v1102 = vpop.f32.mrb[0].mxu0
        %v1103 = vadd.f32 %v984, %v1102
        %v1104 = vpop.f32.mrb[0].mxu0
        %v1105 = vadd.f32 %v986, %v1104
        %1106 = vmatprep.mubr.f32.mxu0 0.0
        %1107 = vmatmul.mubr.f32.gmra.mrb[0].mxu0 %v1019
        %v1108 = vpop.f32.mrb[0].mxu0
        %v1109 = vadd.f32 %v990, %v1108
        %v1110 = vpop.f32.mrb[0].mxu0
        %v1111 = vadd.f32 %v992, %v1110
        %1112 = vmatprep.mubr.f32.mxu0 0.0
        %1113 = vmatmul.mubr.f32.gmra.mrb[0].mxu0 %v1022
        %v1114 = vpop.f32.mrb[0].mxu0
        %v1115 = vadd.f32 %v996, %v1114
        %v1116 = vpop.f32.mrb[0].mxu0
        %v1117 = vadd.f32 %v998, %v1116
        %1118 = vmatprep.mubr.f32.mxu0 0.0
        %1119 = vmatmul.mubr.f32.gmra.mrb[0].mxu0 %v1025
        %v1120 = vpop.f32.mrb[0].mxu0
        %v1121 = vadd.f32 %v1002, %v1120
        %v1122 = vpop.f32.mrb[0].mxu0
        %v1123 = vadd.f32 %v1004, %v1122
        %1124 = vmatprep.mubr.f32.mxu0 0.0
        %1125 = vmatmul.mubr.f32.gmra.mrb[0].mxu0 %v1028
        %v1126 = vpop.f32.mrb[0].mxu0
        %v1127 = vadd.f32 %v1008, %v1126
        %v1128 = vpop.f32.mrb[0].mxu0
        %v1129 = vadd.f32 %v1010, %v1128
        %1130 = vdwg.mxu0
        %v1131 = vld [vmem:[%s6] sm:$0xff]
        %v1132 = vld [vmem:[%s6 + $0x8] sm:$0xff]
        %1134 = vset.pattern.permute.xlu0 0
        %1135 = vperm.xlu0 %1134, %v1131
        %v1136 = vpop.permute.xlu0 %1135
        %1139 = vset.pattern.permute.xlu0 0
        %1140 = vperm.xlu0 %1139, %v1132
        %v1141 = vpop.permute.xlu0 %1140
        %v1143 = vadd.f32 %v1136, %v1109
        %v1144 = vadd.f32 %v1136, %v1111
        %v1145 = vadd.f32 %v1141, %v1115
        %v1146 = vadd.f32 %v1141, %v1117
        %1147 = vrot.lane.b32.xlu0 %v1097, 1
        %v1148 = vpop.permute.xlu0 %1147
        %1149 = vrot.lane.b32.xlu0 %v1103, 1
        %v1150 = vpop.permute.xlu0 %1149
        %1151 = vrot.lane.b32.xlu0 %v1099, 1
        %v1152 = vpop.permute.xlu0 %1151
        %1153 = vrot.lane.b32.xlu0 %v1105, 1
        %v1154 = vpop.permute.xlu0 %1153
        %v1155 = vsel %vm842, %v1148, %v1152
        %v1156 = vsel %vm842, %v1150, %v1154
        %v1157 = vsel %vm842, %v1152, %v1148
        %v1158 = vsel %vm842, %v1154, %v1150
        %v1159 = vadd.f32 %v1143, %v1157
        %v1160 = vadd.f32 %v1144, %v1155
        %v1161 = vadd.f32 %v1145, %v1158
        %v1162 = vadd.f32 %v1146, %v1156
        %1163 = vrot.lane.b32.xlu0 %v1121, 127
        %v1164 = vpop.permute.xlu0 %1163
        %1165 = vrot.lane.b32.xlu0 %v1127, 127
        %v1166 = vpop.permute.xlu0 %1165
        %1167 = vrot.lane.b32.xlu0 %v1123, 127
        %v1168 = vpop.permute.xlu0 %1167
        %1169 = vrot.lane.b32.xlu0 %v1129, 127
        %v1170 = vpop.permute.xlu0 %1169
        %v1171 = vsel %vm859, %v1164, %v1168
        %v1172 = vsel %vm859, %v1166, %v1170
        %v1173 = vsel %vm859, %v1168, %v1164
        %v1174 = vsel %vm859, %v1170, %v1166
        %v1175 = vadd.f32 %v1159, %v1171
        %v1176 = vadd.f32 %v1160, %v1173
        %v1177 = vadd.f32 %v1161, %v1172
        %v1178 = vadd.f32 %v1162, %v1174
        %v1179 = vld [vmem:[#allocation2] sm:$0xff]
        %v1180 = vld [vmem:[#allocation2 + $0x8] sm:$0xff]
        %v1181 = vld [vmem:[#allocation2 + $0x10] sm:$0xff]
        %v1182 = vld [vmem:[#allocation2 + $0x18] sm:$0xff]
        %v1183 = vld [vmem:[#allocation2 + $0x20] sm:$0xff]
        %v1184 = vld [vmem:[#allocation2 + $0x28] sm:$0xff]
        %v1185 = vld [vmem:[#allocation2 + $0x30] sm:$0xff]
        %v1186 = vld [vmem:[#allocation2 + $0x38] sm:$0xff]
        %v1187 = vld [vmem:[#allocation2 + $0x40] sm:$0xff]
        %v1188 = vld [vmem:[#allocation2 + $0x48] sm:$0xff]
        %v1189 = vld [vmem:[#allocation2 + $0x50] sm:$0xff]
        %v1190 = vld [vmem:[#allocation2 + $0x58] sm:$0xff]
        %v1191 = vld [vmem:[%s7] sm:$0xff]
        %v1192 = vld [vmem:[%s7 + $0x8] sm:$0xff]
        %v1193 = vld [vmem:[%s7 + $0x10] sm:$0xff]
        %v1194 = vld [vmem:[%s7 + $0x18] sm:$0xff]
        %v1195 = vld [vmem:[%s7 + $0x20] sm:$0xff]
        %v1196 = vld [vmem:[%s7 + $0x28] sm:$0xff]
        %v1197 = vtanh.pop %v1175
        %v1198 = vtanh.pop %v1176
        %v1199 = vtanh.pop %v1177
        %v1200 = vtanh.pop %v1178
        %v1201 = vmul.f32 %v1197, %v674
        %v1202 = vmul.f32 %v1198, %v675
        %v1203 = vmul.f32 %v1199, %v674
        %v1204 = vmul.f32 %v1200, %v675
        %1205 = vst [vmem:[#allocation2 + $0x60] sm:$0xff] %v1201
        %1206 = vst [vmem:[#allocation2 + $0x68] sm:$0xff] %v1202
        %1207 = vst [vmem:[#allocation2 + $0x70] sm:$0xff] %v1203
        %1208 = vst [vmem:[#allocation2 + $0x78] sm:$0xff] %v1204
        %v1209 = vld [vmem:[%s8] sm:$0xff]
        %v1210 = vld [vmem:[%s8 + $0x8] sm:$0xff]
        %v1211 = vld [vmem:[%s8 + $0x10] sm:$0xff]
        %v1212 = vld [vmem:[%s8 + $0x18] sm:$0xff]
        %v1213 = vld [vmem:[%s8 + $0x20] sm:$0xff]
        %v1214 = vld [vmem:[%s8 + $0x28] sm:$0xff]
        %v1216 = vsel %vm892, %v1209, 0
        %v1219 = vsel %vm892, %v1210, 0
        %v1222 = vsel %vm892, %v1211, 0
        %v1225 = vsel %vm892, %v1212, 0
        %v1228 = vsel %vm892, %v1213, 0
        %v1231 = vsel %vm892, %v1214, 0
        %1233 = vmatprep.subr.mxu0 %v1202
        %1234 = vmatpush1.msra.mxu0 %v1201
        %1235 = vmatprep.subr.mxu0 %v1204
        %1236 = vmatpush1.msra.mxu0 %v1203
        %1237 = vmatprep.subr.mxu0 0.0
        %1238 = vmatpush1.msra.mxu0 0.0
        %1239 = vmatprep.subr.mxu0 0.0
        %1240 = vmatpush1.msra.mxu0 0.0
        %1241 = vmatprep.subr.mxu0 0.0
        %1242 = vmatpush1.msra.mxu0 0.0
        %1243 = vmatprep.subr.mxu0 0.0
        %1244 = vmatpush1.msra.mxu0 0.0
        %1245 = vmatprep.subr.mxu0 0.0
        %1246 = vmatpush1.msra.mxu0 0.0
        %1247 = vmatprep.subr.mxu0 0.0
        %1248 = vmatpush1.msra.mxu0 0.0
        %1249 = vmatprep.subr.mxu0 0.0
        %1250 = vmatpush1.msra.mxu0 0.0
        %1251 = vmatprep.subr.mxu0 0.0
        %1252 = vmatpush1.msra.mxu0 0.0
        %1253 = vmatprep.subr.mxu0 0.0
        %1254 = vmatpush1.msra.mxu0 0.0
        %1255 = vmatprep.subr.mxu0 0.0
        %1256 = vmatpush1.msra.mxu0 0.0
        %1257 = vmatprep.subr.mxu0 0.0
        %1258 = vmatpush1.msra.mxu0 0.0
        %1259 = vmatprep.subr.mxu0 0.0
        %1260 = vmatpush1.msra.mxu0 0.0
        %1261 = vmatprep.subr.mxu0 0.0
        %1262 = vmatpush1.msra.mxu0 0.0
        %1263 = vmatprep.subr.mxu0 0.0
        %1264 = vmatpush1.msra.mxu0 0.0
        %1265 = vmatprep.subr.mxu0 0.0
        %1266 = vmatpush1.msra.mxu0 0.0
        %1267 = vmatprep.subr.mxu0 0.0
        %1268 = vmatpush1.msra.mxu0 0.0
        %1269 = vmatprep.subr.mxu0 0.0
        %1270 = vmatpush1.msra.mxu0 0.0
        %1271 = vmatprep.subr.mxu0 0.0
        %1272 = vmatpush1.msra.mxu0 0.0
        %1273 = vmatprep.subr.mxu0 0.0
        %1274 = vmatpush1.msra.mxu0 0.0
        %1275 = vmatprep.subr.mxu0 0.0
        %1276 = vmatpush1.msra.mxu0 0.0
        %1277 = vmatprep.subr.mxu0 0.0
        %1278 = vmatpush1.msra.mxu0 0.0
        %1279 = vmatprep.subr.mxu0 0.0
        %1280 = vmatpush1.msra.mxu0 0.0
        %1281 = vmatprep.subr.mxu0 0.0
        %1282 = vmatpush1.msra.mxu0 0.0
        %1283 = vmatprep.subr.mxu0 0.0
        %1284 = vmatpush1.msra.mxu0 0.0
        %1285 = vmatprep.subr.mxu0 0.0
        %1286 = vmatpush1.msra.mxu0 0.0
        %1287 = vmatprep.subr.mxu0 0.0
        %1288 = vmatpush1.msra.mxu0 0.0
        %1289 = vmatprep.subr.mxu0 0.0
        %1290 = vmatpush1.msra.mxu0 0.0
        %1291 = vmatprep.subr.mxu0 0.0
        %1292 = vmatpush1.msra.mxu0 0.0
        %1293 = vmatprep.subr.mxu0 0.0
        %1294 = vmatpush1.msra.mxu0 0.0
        %1295 = vmatprep.subr.mxu0 0.0
        %1296 = vmatpush1.msra.mxu0 0.0
        %1297 = vmatprep.mubr.f32.mxu0 0.0
        %1298 = vmatmul.mubr.f32.gmra.mrb[0].mxu0 %v1216
        %v1299 = vpop.f32.mrb[0].mxu0
        %v1300 = vadd.f32 0.0, %v1299
        %v1301 = vpop.f32.mrb[0].mxu0
        %v1302 = vadd.f32 0.0, %v1301
        %1303 = vmatprep.mubr.f32.mxu0 0.0
        %1304 = vmatmul.mubr.f32.gmra.mrb[0].mxu0 %v1219
        %v1305 = vpop.f32.mrb[0].mxu0
        %v1306 = vadd.f32 0.0, %v1305
        %v1307 = vpop.f32.mrb[0].mxu0
        %v1308 = vadd.f32 0.0, %v1307
        %1309 = vmatprep.mubr.f32.mxu0 0.0
        %1310 = vmatmul.mubr.f32.gmra.mrb[0].mxu0 %v1222
        %v1311 = vpop.f32.mrb[0].mxu0
        %v1312 = vadd.f32 0.0, %v1311
        %v1313 = vpop.f32.mrb[0].mxu0
        %v1314 = vadd.f32 0.0, %v1313
        %1315 = vmatprep.mubr.f32.mxu0 0.0
        %1316 = vmatmul.mubr.f32.gmra.mrb[0].mxu0 %v1225
        %v1317 = vpop.f32.mrb[0].mxu0
        %v1318 = vadd.f32 0.0, %v1317
        %v1319 = vpop.f32.mrb[0].mxu0
        %v1320 = vadd.f32 0.0, %v1319
        %1321 = vmatprep.mubr.f32.mxu0 0.0
        %1322 = vmatmul.mubr.f32.gmra.mrb[0].mxu0 %v1228
        %v1323 = vpop.f32.mrb[0].mxu0
        %v1324 = vadd.f32 0.0, %v1323
        %v1325 = vpop.f32.mrb[0].mxu0
        %v1326 = vadd.f32 0.0, %v1325
        %1327 = vmatprep.mubr.f32.mxu0 0.0
        %1328 = vmatmul.mubr.f32.gmra.mrb[0].mxu0 %v1231
        %v1329 = vpop.f32.mrb[0].mxu0
        %v1330 = vadd.f32 0.0, %v1329
        %v1331 = vpop.f32.mrb[0].mxu0
        %v1332 = vadd.f32 0.0, %v1331
        %1333 = vdwg.mxu0
        %vm1334 = vcmask 392192
        %v1336 = vsel %vm1334, %v1191, 0
        %v1339 = vsel %vm1334, %v1192, 0
        %v1342 = vsel %vm1334, %v1193, 0
        %v1345 = vsel %vm1334, %v1194, 0
        %v1348 = vsel %vm1334, %v1195, 0
        %v1351 = vsel %vm1334, %v1196, 0
        %1353 = vmatprep.subr.mxu0 %v1180
        %1354 = vmatpush1.msra.mxu0 %v1179
        %1355 = vmatprep.subr.mxu0 %v1182
        %1356 = vmatpush1.msra.mxu0 %v1181
        %1357 = vmatprep.subr.mxu0 %v1184
        %1358 = vmatpush1.msra.mxu0 %v1183
        %1359 = vmatprep.subr.mxu0 %v1186
        %1360 = vmatpush1.msra.mxu0 %v1185
        %1361 = vmatprep.subr.mxu0 %v1188
        %1362 = vmatpush1.msra.mxu0 %v1187
        %1363 = vmatprep.subr.mxu0 %v1190
        %1364 = vmatpush1.msra.mxu0 %v1189
        %1365 = vmatprep.subr.mxu0 0.0
        %1366 = vmatpush1.msra.mxu0 0.0
        %1367 = vmatprep.subr.mxu0 0.0
        %1368 = vmatpush1.msra.mxu0 0.0
        %1369 = vmatprep.subr.mxu0 0.0
        %1370 = vmatpush1.msra.mxu0 0.0
        %1371 = vmatprep.subr.mxu0 0.0
        %1372 = vmatpush1.msra.mxu0 0.0
        %1373 = vmatprep.subr.mxu0 0.0
        %1374 = vmatpush1.msra.mxu0 0.0
        %1375 = vmatprep.subr.mxu0 0.0
        %1376 = vmatpush1.msra.mxu0 0.0
        %1377 = vmatprep.subr.mxu0 0.0
        %1378 = vmatpush1.msra.mxu0 0.0
        %1379 = vmatprep.subr.mxu0 0.0
        %1380 = vmatpush1.msra.mxu0 0.0
        %1381 = vmatprep.subr.mxu0 0.0
        %1382 = vmatpush1.msra.mxu0 0.0
        %1383 = vmatprep.subr.mxu0 0.0
        %1384 = vmatpush1.msra.mxu0 0.0
        %1385 = vmatprep.subr.mxu0 0.0
        %1386 = vmatpush1.msra.mxu0 0.0
        %1387 = vmatprep.subr.mxu0 0.0
        %1388 = vmatpush1.msra.mxu0 0.0
        %1389 = vmatprep.subr.mxu0 0.0
        %1390 = vmatpush1.msra.mxu0 0.0
        %1391 = vmatprep.subr.mxu0 0.0
        %1392 = vmatpush1.msra.mxu0 0.0
        %1393 = vmatprep.subr.mxu0 0.0
        %1394 = vmatpush1.msra.mxu0 0.0
        %1395 = vmatprep.subr.mxu0 0.0
        %1396 = vmatpush1.msra.mxu0 0.0
        %1397 = vmatprep.subr.mxu0 0.0
        %1398 = vmatpush1.msra.mxu0 0.0
        %1399 = vmatprep.subr.mxu0 0.0
        %1400 = vmatpush1.msra.mxu0 0.0
        %1401 = vmatprep.subr.mxu0 0.0
        %1402 = vmatpush1.msra.mxu0 0.0
        %1403 = vmatprep.subr.mxu0 0.0
        %1404 = vmatpush1.msra.mxu0 0.0
        %1405 = vmatprep.subr.mxu0 0.0
        %1406 = vmatpush1.msra.mxu0 0.0
        %1407 = vmatprep.subr.mxu0 0.0
        %1408 = vmatpush1.msra.mxu0 0.0
        %1409 = vmatprep.subr.mxu0 0.0
        %1410 = vmatpush1.msra.mxu0 0.0
        %1411 = vmatprep.subr.mxu0 0.0
        %1412 = vmatpush1.msra.mxu0 0.0
        %1413 = vmatprep.subr.mxu0 0.0
        %1414 = vmatpush1.msra.mxu0 0.0
        %1415 = vmatprep.subr.mxu0 0.0
        %1416 = vmatpush1.msra.mxu0 0.0
        %1417 = vmatprep.mubr.f32.mxu0 0.0
        %1418 = vmatmul.mubr.f32.gmra.mrb[0].mxu0 %v1336
        %v1419 = vpop.f32.mrb[0].mxu0
        %v1420 = vadd.f32 %v1300, %v1419
        %v1421 = vpop.f32.mrb[0].mxu0
        %v1422 = vadd.f32 %v1302, %v1421
        %1423 = vmatprep.mubr.f32.mxu0 0.0
        %1424 = vmatmul.mubr.f32.gmra.mrb[0].mxu0 %v1339
        %v1425 = vpop.f32.mrb[0].mxu0
        %v1426 = vadd.f32 %v1306, %v1425
        %v1427 = vpop.f32.mrb[0].mxu0
        %v1428 = vadd.f32 %v1308, %v1427
        %1429 = vmatprep.mubr.f32.mxu0 0.0
        %1430 = vmatmul.mubr.f32.gmra.mrb[0].mxu0 %v1342
        %v1431 = vpop.f32.mrb[0].mxu0
        %v1432 = vadd.f32 %v1312, %v1431
        %v1433 = vpop.f32.mrb[0].mxu0
        %v1434 = vadd.f32 %v1314, %v1433
        %1435 = vmatprep.mubr.f32.mxu0 0.0
        %1436 = vmatmul.mubr.f32.gmra.mrb[0].mxu0 %v1345
        %v1437 = vpop.f32.mrb[0].mxu0
        %v1438 = vadd.f32 %v1318, %v1437
        %v1439 = vpop.f32.mrb[0].mxu0
        %v1440 = vadd.f32 %v1320, %v1439
        %1441 = vmatprep.mubr.f32.mxu0 0.0
        %1442 = vmatmul.mubr.f32.gmra.mrb[0].mxu0 %v1348
        %v1443 = vpop.f32.mrb[0].mxu0
        %v1444 = vadd.f32 %v1324, %v1443
        %v1445 = vpop.f32.mrb[0].mxu0
        %v1446 = vadd.f32 %v1326, %v1445
        %1447 = vmatprep.mubr.f32.mxu0 0.0
        %1448 = vmatmul.mubr.f32.gmra.mrb[0].mxu0 %v1351
        %v1449 = vpop.f32.mrb[0].mxu0
        %v1450 = vadd.f32 %v1330, %v1449
        %v1451 = vpop.f32.mrb[0].mxu0
        %v1452 = vadd.f32 %v1332, %v1451
        %1453 = vdwg.mxu0
        %v1454 = vld [vmem:[%s9] sm:$0xff]
        %v1455 = vld [vmem:[%s9 + $0x8] sm:$0xff]
        %1457 = vset.pattern.permute.xlu0 0
        %1458 = vperm.xlu0 %1457, %v1454
        %v1459 = vpop.permute.xlu0 %1458
        %1462 = vset.pattern.permute.xlu0 0
        %1463 = vperm.xlu0 %1462, %v1455
        %v1464 = vpop.permute.xlu0 %1463
        %v1466 = vadd.f32 %v1459, %v1432
        %v1467 = vadd.f32 %v1459, %v1434
        %v1468 = vadd.f32 %v1464, %v1438
        %v1469 = vadd.f32 %v1464, %v1440
        %1470 = vrot.lane.b32.xlu0 %v1420, 1
        %v1471 = vpop.permute.xlu0 %1470
        %1472 = vrot.lane.b32.xlu0 %v1426, 1
        %v1473 = vpop.permute.xlu0 %1472
        %1474 = vrot.lane.b32.xlu0 %v1422, 1
        %v1475 = vpop.permute.xlu0 %1474
        %1476 = vrot.lane.b32.xlu0 %v1428, 1
        %v1477 = vpop.permute.xlu0 %1476
        %v1478 = vsel %vm842, %v1471, %v1475
        %v1479 = vsel %vm842, %v1473, %v1477
        %v1480 = vsel %vm842, %v1475, %v1471
        %v1481 = vsel %vm842, %v1477, %v1473
        %v1482 = vadd.f32 %v1466, %v1480
        %v1483 = vadd.f32 %v1467, %v1478
        %v1484 = vadd.f32 %v1468, %v1481
        %v1485 = vadd.f32 %v1469, %v1479
        %1486 = vrot.lane.b32.xlu0 %v1444, 127
        %v1487 = vpop.permute.xlu0 %1486
        %1488 = vrot.lane.b32.xlu0 %v1450, 127
        %v1489 = vpop.permute.xlu0 %1488
        %1490 = vrot.lane.b32.xlu0 %v1446, 127
        %v1491 = vpop.permute.xlu0 %1490
        %1492 = vrot.lane.b32.xlu0 %v1452, 127
        %v1493 = vpop.permute.xlu0 %1492
        %v1494 = vsel %vm859, %v1487, %v1491
        %v1495 = vsel %vm859, %v1489, %v1493
        %v1496 = vsel %vm859, %v1491, %v1487
        %v1497 = vsel %vm859, %v1493, %v1489
        %v1498 = vadd.f32 %v1482, %v1494
        %v1499 = vadd.f32 %v1483, %v1496
        %v1500 = vadd.f32 %v1484, %v1495
        %v1501 = vadd.f32 %v1485, %v1497
        %v1502 = vld [vmem:[#allocation2] sm:$0xff]
        %v1503 = vld [vmem:[#allocation2 + $0x8] sm:$0xff]
        %v1504 = vld [vmem:[#allocation2 + $0x10] sm:$0xff]
        %v1505 = vld [vmem:[#allocation2 + $0x18] sm:$0xff]
        %v1506 = vld [vmem:[#allocation2 + $0x20] sm:$0xff]
        %v1507 = vld [vmem:[#allocation2 + $0x28] sm:$0xff]
        %v1508 = vld [vmem:[#allocation2 + $0x30] sm:$0xff]
        %v1509 = vld [vmem:[#allocation2 + $0x38] sm:$0xff]
        %v1510 = vld [vmem:[#allocation2 + $0x40] sm:$0xff]
        %v1511 = vld [vmem:[#allocation2 + $0x48] sm:$0xff]
        %v1512 = vld [vmem:[#allocation2 + $0x50] sm:$0xff]
        %v1513 = vld [vmem:[#allocation2 + $0x58] sm:$0xff]
        %v1514 = vld [vmem:[#allocation2 + $0x60] sm:$0xff]
        %v1515 = vld [vmem:[#allocation2 + $0x68] sm:$0xff]
        %v1516 = vld [vmem:[#allocation2 + $0x70] sm:$0xff]
        %v1517 = vld [vmem:[#allocation2 + $0x78] sm:$0xff]
        %v1518 = vld [vmem:[%s10] sm:$0xff]
        %v1519 = vld [vmem:[%s10 + $0x8] sm:$0xff]
        %v1520 = vld [vmem:[%s10 + $0x10] sm:$0xff]
        %v1521 = vld [vmem:[%s10 + $0x18] sm:$0xff]
        %v1522 = vld [vmem:[%s10 + $0x20] sm:$0xff]
        %v1523 = vld [vmem:[%s10 + $0x28] sm:$0xff]
        %v1524 = vtanh.pop %v1498
        %v1525 = vtanh.pop %v1499
        %v1526 = vtanh.pop %v1500
        %v1527 = vtanh.pop %v1501
        %v1528 = vmul.f32 %v1524, %v674
        %v1529 = vmul.f32 %v1525, %v675
        %v1530 = vmul.f32 %v1526, %v674
        %v1531 = vmul.f32 %v1527, %v675
        %1532 = vst [vmem:[#allocation2 + $0x80] sm:$0xff] %v1528
        %1533 = vst [vmem:[#allocation2 + $0x88] sm:$0xff] %v1529
        %1534 = vst [vmem:[#allocation2 + $0x90] sm:$0xff] %v1530
        %1535 = vst [vmem:[#allocation2 + $0x98] sm:$0xff] %v1531
        %v1536 = vld [vmem:[%s11] sm:$0xff]
        %v1537 = vld [vmem:[%s11 + $0x8] sm:$0xff]
        %v1538 = vld [vmem:[%s11 + $0x10] sm:$0xff]
        %v1539 = vld [vmem:[%s11 + $0x18] sm:$0xff]
        %v1540 = vld [vmem:[%s11 + $0x20] sm:$0xff]
        %v1541 = vld [vmem:[%s11 + $0x28] sm:$0xff]
        %v1543 = vsel %vm892, %v1536, 0
        %v1546 = vsel %vm892, %v1537, 0
        %v1549 = vsel %vm892, %v1538, 0
        %v1552 = vsel %vm892, %v1539, 0
        %v1555 = vsel %vm892, %v1540, 0
        %v1558 = vsel %vm892, %v1541, 0
        %1560 = vmatprep.subr.mxu0 %v1529
        %1561 = vmatpush1.msra.mxu0 %v1528
        %1562 = vmatprep.subr.mxu0 %v1531
        %1563 = vmatpush1.msra.mxu0 %v1530
        %1564 = vmatprep.subr.mxu0 0.0
        %1565 = vmatpush1.msra.mxu0 0.0
        %1566 = vmatprep.subr.mxu0 0.0
        %1567 = vmatpush1.msra.mxu0 0.0
        %1568 = vmatprep.subr.mxu0 0.0
        %1569 = vmatpush1.msra.mxu0 0.0
        %1570 = vmatprep.subr.mxu0 0.0
        %1571 = vmatpush1.msra.mxu0 0.0
        %1572 = vmatprep.subr.mxu0 0.0
        %1573 = vmatpush1.msra.mxu0 0.0
        %1574 = vmatprep.subr.mxu0 0.0
        %1575 = vmatpush1.msra.mxu0 0.0
        %1576 = vmatprep.subr.mxu0 0.0
        %1577 = vmatpush1.msra.mxu0 0.0
        %1578 = vmatprep.subr.mxu0 0.0
        %1579 = vmatpush1.msra.mxu0 0.0
        %1580 = vmatprep.subr.mxu0 0.0
        %1581 = vmatpush1.msra.mxu0 0.0
        %1582 = vmatprep.subr.mxu0 0.0
        %1583 = vmatpush1.msra.mxu0 0.0
        %1584 = vmatprep.subr.mxu0 0.0
        %1585 = vmatpush1.msra.mxu0 0.0
        %1586 = vmatprep.subr.mxu0 0.0
        %1587 = vmatpush1.msra.mxu0 0.0
        %1588 = vmatprep.subr.mxu0 0.0
        %1589 = vmatpush1.msra.mxu0 0.0
        %1590 = vmatprep.subr.mxu0 0.0
        %1591 = vmatpush1.msra.mxu0 0.0
        %1592 = vmatprep.subr.mxu0 0.0
        %1593 = vmatpush1.msra.mxu0 0.0
        %1594 = vmatprep.subr.mxu0 0.0
        %1595 = vmatpush1.msra.mxu0 0.0
        %1596 = vmatprep.subr.mxu0 0.0
        %1597 = vmatpush1.msra.mxu0 0.0
        %1598 = vmatprep.subr.mxu0 0.0
        %1599 = vmatpush1.msra.mxu0 0.0
        %1600 = vmatprep.subr.mxu0 0.0
        %1601 = vmatpush1.msra.mxu0 0.0
        %1602 = vmatprep.subr.mxu0 0.0
        %1603 = vmatpush1.msra.mxu0 0.0
        %1604 = vmatprep.subr.mxu0 0.0
        %1605 = vmatpush1.msra.mxu0 0.0
        %1606 = vmatprep.subr.mxu0 0.0
        %1607 = vmatpush1.msra.mxu0 0.0
        %1608 = vmatprep.subr.mxu0 0.0
        %1609 = vmatpush1.msra.mxu0 0.0
        %1610 = vmatprep.subr.mxu0 0.0
        %1611 = vmatpush1.msra.mxu0 0.0
        %1612 = vmatprep.subr.mxu0 0.0
        %1613 = vmatpush1.msra.mxu0 0.0
        %1614 = vmatprep.subr.mxu0 0.0
        %1615 = vmatpush1.msra.mxu0 0.0
        %1616 = vmatprep.subr.mxu0 0.0
        %1617 = vmatpush1.msra.mxu0 0.0
        %1618 = vmatprep.subr.mxu0 0.0
        %1619 = vmatpush1.msra.mxu0 0.0
        %1620 = vmatprep.subr.mxu0 0.0
        %1621 = vmatpush1.msra.mxu0 0.0
        %1622 = vmatprep.subr.mxu0 0.0
        %1623 = vmatpush1.msra.mxu0 0.0
        %1624 = vmatprep.mubr.f32.mxu0 0.0
        %1625 = vmatmul.mubr.f32.gmra.mrb[0].mxu0 %v1543
        %v1626 = vpop.f32.mrb[0].mxu0
        %v1627 = vadd.f32 0.0, %v1626
        %v1628 = vpop.f32.mrb[0].mxu0
        %v1629 = vadd.f32 0.0, %v1628
        %1630 = vmatprep.mubr.f32.mxu0 0.0
        %1631 = vmatmul.mubr.f32.gmra.mrb[0].mxu0 %v1546
        %v1632 = vpop.f32.mrb[0].mxu0
        %v1633 = vadd.f32 0.0, %v1632
        %v1634 = vpop.f32.mrb[0].mxu0
        %v1635 = vadd.f32 0.0, %v1634
        %1636 = vmatprep.mubr.f32.mxu0 0.0
        %1637 = vmatmul.mubr.f32.gmra.mrb[0].mxu0 %v1549
        %v1638 = vpop.f32.mrb[0].mxu0
        %v1639 = vadd.f32 0.0, %v1638
        %v1640 = vpop.f32.mrb[0].mxu0
        %v1641 = vadd.f32 0.0, %v1640
        %1642 = vmatprep.mubr.f32.mxu0 0.0
        %1643 = vmatmul.mubr.f32.gmra.mrb[0].mxu0 %v1552
        %v1644 = vpop.f32.mrb[0].mxu0
        %v1645 = vadd.f32 0.0, %v1644
        %v1646 = vpop.f32.mrb[0].mxu0
        %v1647 = vadd.f32 0.0, %v1646
        %1648 = vmatprep.mubr.f32.mxu0 0.0
        %1649 = vmatmul.mubr.f32.gmra.mrb[0].mxu0 %v1555
        %v1650 = vpop.f32.mrb[0].mxu0
        %v1651 = vadd.f32 0.0, %v1650
        %v1652 = vpop.f32.mrb[0].mxu0
        %v1653 = vadd.f32 0.0, %v1652
        %1654 = vmatprep.mubr.f32.mxu0 0.0
        %1655 = vmatmul.mubr.f32.gmra.mrb[0].mxu0 %v1558
        %v1656 = vpop.f32.mrb[0].mxu0
        %v1657 = vadd.f32 0.0, %v1656
        %v1658 = vpop.f32.mrb[0].mxu0
        %v1659 = vadd.f32 0.0, %v1658
        %1660 = vdwg.mxu0
        %vm1661 = vcmask 523264
        %v1663 = vsel %vm1661, %v1518, 0
        %v1666 = vsel %vm1661, %v1519, 0
        %v1669 = vsel %vm1661, %v1520, 0
        %v1672 = vsel %vm1661, %v1521, 0
        %v1675 = vsel %vm1661, %v1522, 0
        %v1678 = vsel %vm1661, %v1523, 0
        %1680 = vmatprep.subr.mxu0 %v1503
        %1681 = vmatpush1.msra.mxu0 %v1502
        %1682 = vmatprep.subr.mxu0 %v1505
        %1683 = vmatpush1.msra.mxu0 %v1504
        %1684 = vmatprep.subr.mxu0 %v1507
        %1685 = vmatpush1.msra.mxu0 %v1506
        %1686 = vmatprep.subr.mxu0 %v1509
        %1687 = vmatpush1.msra.mxu0 %v1508
        %1688 = vmatprep.subr.mxu0 %v1511
        %1689 = vmatpush1.msra.mxu0 %v1510
        %1690 = vmatprep.subr.mxu0 %v1513
        %1691 = vmatpush1.msra.mxu0 %v1512
        %1692 = vmatprep.subr.mxu0 %v1515
        %1693 = vmatpush1.msra.mxu0 %v1514
        %1694 = vmatprep.subr.mxu0 %v1517
        %1695 = vmatpush1.msra.mxu0 %v1516
        %1696 = vmatprep.subr.mxu0 0.0
        %1697 = vmatpush1.msra.mxu0 0.0
        %1698 = vmatprep.subr.mxu0 0.0
        %1699 = vmatpush1.msra.mxu0 0.0
        %1700 = vmatprep.subr.mxu0 0.0
        %1701 = vmatpush1.msra.mxu0 0.0
        %1702 = vmatprep.subr.mxu0 0.0
        %1703 = vmatpush1.msra.mxu0 0.0
        %1704 = vmatprep.subr.mxu0 0.0
        %1705 = vmatpush1.msra.mxu0 0.0
        %1706 = vmatprep.subr.mxu0 0.0
        %1707 = vmatpush1.msra.mxu0 0.0
        %1708 = vmatprep.subr.mxu0 0.0
        %1709 = vmatpush1.msra.mxu0 0.0
        %1710 = vmatprep.subr.mxu0 0.0
        %1711 = vmatpush1.msra.mxu0 0.0
        %1712 = vmatprep.subr.mxu0 0.0
        %1713 = vmatpush1.msra.mxu0 0.0
        %1714 = vmatprep.subr.mxu0 0.0
        %1715 = vmatpush1.msra.mxu0 0.0
        %1716 = vmatprep.subr.mxu0 0.0
        %1717 = vmatpush1.msra.mxu0 0.0
        %1718 = vmatprep.subr.mxu0 0.0
        %1719 = vmatpush1.msra.mxu0 0.0
        %1720 = vmatprep.subr.mxu0 0.0
        %1721 = vmatpush1.msra.mxu0 0.0
        %1722 = vmatprep.subr.mxu0 0.0
        %1723 = vmatpush1.msra.mxu0 0.0
        %1724 = vmatprep.subr.mxu0 0.0
        %1725 = vmatpush1.msra.mxu0 0.0
        %1726 = vmatprep.subr.mxu0 0.0
        %1727 = vmatpush1.msra.mxu0 0.0
        %1728 = vmatprep.subr.mxu0 0.0
        %1729 = vmatpush1.msra.mxu0 0.0
        %1730 = vmatprep.subr.mxu0 0.0
        %1731 = vmatpush1.msra.mxu0 0.0
        %1732 = vmatprep.subr.mxu0 0.0
        %1733 = vmatpush1.msra.mxu0 0.0
        %1734 = vmatprep.subr.mxu0 0.0
        %1735 = vmatpush1.msra.mxu0 0.0
        %1736 = vmatprep.subr.mxu0 0.0
        %1737 = vmatpush1.msra.mxu0 0.0
        %1738 = vmatprep.subr.mxu0 0.0
        %1739 = vmatpush1.msra.mxu0 0.0
        %1740 = vmatprep.subr.mxu0 0.0
        %1741 = vmatpush1.msra.mxu0 0.0
        %1742 = vmatprep.subr.mxu0 0.0
        %1743 = vmatpush1.msra.mxu0 0.0
        %1744 = vmatprep.mubr.f32.mxu0 0.0
        %1745 = vmatmul.mubr.f32.gmra.mrb[0].mxu0 %v1663
        %v1746 = vpop.f32.mrb[0].mxu0
        %v1747 = vadd.f32 %v1627, %v1746
        %v1748 = vpop.f32.mrb[0].mxu0
        %v1749 = vadd.f32 %v1629, %v1748
        %1750 = vmatprep.mubr.f32.mxu0 0.0
        %1751 = vmatmul.mubr.f32.gmra.mrb[0].mxu0 %v1666
        %v1752 = vpop.f32.mrb[0].mxu0
        %v1753 = vadd.f32 %v1633, %v1752
        %v1754 = vpop.f32.mrb[0].mxu0
        %v1755 = vadd.f32 %v1635, %v1754
        %1756 = vmatprep.mubr.f32.mxu0 0.0
        %1757 = vmatmul.mubr.f32.gmra.mrb[0].mxu0 %v1669
        %v1758 = vpop.f32.mrb[0].mxu0
        %v1759 = vadd.f32 %v1639, %v1758
        %v1760 = vpop.f32.mrb[0].mxu0
        %v1761 = vadd.f32 %v1641, %v1760
        %1762 = vmatprep.mubr.f32.mxu0 0.0
        %1763 = vmatmul.mubr.f32.gmra.mrb[0].mxu0 %v1672
        %v1764 = vpop.f32.mrb[0].mxu0
        %v1765 = vadd.f32 %v1645, %v1764
        %v1766 = vpop.f32.mrb[0].mxu0
        %v1767 = vadd.f32 %v1647, %v1766
        %1768 = vmatprep.mubr.f32.mxu0 0.0
        %1769 = vmatmul.mubr.f32.gmra.mrb[0].mxu0 %v1675
        %v1770 = vpop.f32.mrb[0].mxu0
        %v1771 = vadd.f32 %v1651, %v1770
        %v1772 = vpop.f32.mrb[0].mxu0
        %v1773 = vadd.f32 %v1653, %v1772
        %1774 = vmatprep.mubr.f32.mxu0 0.0
        %1775 = vmatmul.mubr.f32.gmra.mrb[0].mxu0 %v1678
        %v1776 = vpop.f32.mrb[0].mxu0
        %v1777 = vadd.f32 %v1657, %v1776
        %v1778 = vpop.f32.mrb[0].mxu0
        %v1779 = vadd.f32 %v1659, %v1778
        %1780 = vdwg.mxu0
        %v1781 = vld [vmem:[%s12] sm:$0xff]
        %v1782 = vld [vmem:[%s12 + $0x8] sm:$0xff]
        %1784 = vset.pattern.permute.xlu0 0
        %1785 = vperm.xlu0 %1784, %v1781
        %v1786 = vpop.permute.xlu0 %1785
        %1789 = vset.pattern.permute.xlu0 0
        %1790 = vperm.xlu0 %1789, %v1782
        %v1791 = vpop.permute.xlu0 %1790
        %v1793 = vadd.f32 %v1786, %v1759
        %v1794 = vadd.f32 %v1786, %v1761
        %v1795 = vadd.f32 %v1791, %v1765
        %v1796 = vadd.f32 %v1791, %v1767
        %1797 = vrot.lane.b32.xlu0 %v1747, 1
        %v1798 = vpop.permute.xlu0 %1797
        %1799 = vrot.lane.b32.xlu0 %v1753, 1
        %v1800 = vpop.permute.xlu0 %1799
        %1801 = vrot.lane.b32.xlu0 %v1749, 1
        %v1802 = vpop.permute.xlu0 %1801
        %1803 = vrot.lane.b32.xlu0 %v1755, 1
        %v1804 = vpop.permute.xlu0 %1803
        %v1805 = vsel %vm842, %v1798, %v1802
        %v1806 = vsel %vm842, %v1800, %v1804
        %v1807 = vsel %vm842, %v1802, %v1798
        %v1808 = vsel %vm842, %v1804, %v1800
        %v1809 = vadd.f32 %v1793, %v1807
        %v1810 = vadd.f32 %v1794, %v1805
        %v1811 = vadd.f32 %v1795, %v1808
        %v1812 = vadd.f32 %v1796, %v1806
        %1813 = vrot.lane.b32.xlu0 %v1771, 127
        %v1814 = vpop.permute.xlu0 %1813
        %1815 = vrot.lane.b32.xlu0 %v1777, 127
        %v1816 = vpop.permute.xlu0 %1815
        %1817 = vrot.lane.b32.xlu0 %v1773, 127
        %v1818 = vpop.permute.xlu0 %1817
        %1819 = vrot.lane.b32.xlu0 %v1779, 127
        %v1820 = vpop.permute.xlu0 %1819
        %v1821 = vsel %vm859, %v1814, %v1818
        %v1822 = vsel %vm859, %v1816, %v1820
        %v1823 = vsel %vm859, %v1818, %v1814
        %v1824 = vsel %vm859, %v1820, %v1816
        %v1825 = vadd.f32 %v1809, %v1821
        %v1826 = vadd.f32 %v1810, %v1823
        %v1827 = vadd.f32 %v1811, %v1822
        %v1828 = vadd.f32 %v1812, %v1824
        %v1829 = vld [vmem:[#allocation2] sm:$0xff]
        %v1830 = vld [vmem:[#allocation2 + $0x8] sm:$0xff]
        %v1831 = vld [vmem:[#allocation2 + $0x10] sm:$0xff]
        %v1832 = vld [vmem:[#allocation2 + $0x18] sm:$0xff]
        %v1833 = vld [vmem:[#allocation2 + $0x20] sm:$0xff]
        %v1834 = vld [vmem:[#allocation2 + $0x28] sm:$0xff]
        %v1835 = vld [vmem:[#allocation2 + $0x30] sm:$0xff]
        %v1836 = vld [vmem:[#allocation2 + $0x38] sm:$0xff]
        %v1837 = vld [vmem:[#allocation2 + $0x40] sm:$0xff]
        %v1838 = vld [vmem:[#allocation2 + $0x48] sm:$0xff]
        %v1839 = vld [vmem:[#allocation2 + $0x50] sm:$0xff]
        %v1840 = vld [vmem:[#allocation2 + $0x58] sm:$0xff]
        %v1841 = vld [vmem:[#allocation2 + $0x60] sm:$0xff]
        %v1842 = vld [vmem:[#allocation2 + $0x68] sm:$0xff]
        %v1843 = vld [vmem:[#allocation2 + $0x70] sm:$0xff]
        %v1844 = vld [vmem:[#allocation2 + $0x78] sm:$0xff]
        %v1845 = vld [vmem:[#allocation2 + $0x80] sm:$0xff]
        %v1846 = vld [vmem:[#allocation2 + $0x88] sm:$0xff]
        %v1847 = vld [vmem:[#allocation2 + $0x90] sm:$0xff]
        %v1848 = vld [vmem:[#allocation2 + $0x98] sm:$0xff]
        %v1849 = vld [vmem:[%s13] sm:$0xff]
        %v1850 = vld [vmem:[%s13 + $0x8] sm:$0xff]
        %v1851 = vld [vmem:[%s13 + $0x10] sm:$0xff]
        %v1852 = vld [vmem:[%s13 + $0x18] sm:$0xff]
        %v1853 = vld [vmem:[%s13 + $0x20] sm:$0xff]
        %v1854 = vld [vmem:[%s13 + $0x28] sm:$0xff]
        %v1855 = vld [vmem:[%s13 + $0x30] sm:$0xff]
        %v1856 = vld [vmem:[%s13 + $0x38] sm:$0xff]
        %v1857 = vld [vmem:[%s13 + $0x40] sm:$0xff]
        %v1858 = vld [vmem:[%s13 + $0x48] sm:$0xff]
        %v1859 = vld [vmem:[%s13 + $0x50] sm:$0xff]
        %v1860 = vld [vmem:[%s13 + $0x58] sm:$0xff]
        %v1861 = vtanh.pop %v1825
        %v1862 = vtanh.pop %v1826
        %v1863 = vtanh.pop %v1827
        %v1864 = vtanh.pop %v1828
        %v1865 = vmul.f32 %v1861, %v674
        %v1866 = vmul.f32 %v1862, %v675
        %v1867 = vmul.f32 %v1863, %v674
        %v1868 = vmul.f32 %v1864, %v675
        %v1869 = vld [vmem:[%s14] sm:$0xff]
        %v1870 = vld [vmem:[%s14 + $0x8] sm:$0xff]
        %v1871 = vld [vmem:[%s14 + $0x10] sm:$0xff]
        %v1872 = vld [vmem:[%s14 + $0x18] sm:$0xff]
        %v1873 = vld [vmem:[%s14 + $0x20] sm:$0xff]
        %v1874 = vld [vmem:[%s14 + $0x28] sm:$0xff]
        %v1875 = vld [vmem:[%s14 + $0x30] sm:$0xff]
        %v1876 = vld [vmem:[%s14 + $0x38] sm:$0xff]
        %v1877 = vld [vmem:[%s14 + $0x40] sm:$0xff]
        %v1878 = vld [vmem:[%s14 + $0x48] sm:$0xff]
        %v1879 = vld [vmem:[%s14 + $0x50] sm:$0xff]
        %v1880 = vld [vmem:[%s14 + $0x58] sm:$0xff]
        %v1882 = vsel %vm892, %v1869, 0
        %v1885 = vsel %vm892, %v1870, 0
        %v1888 = vsel %vm892, %v1871, 0
        %v1891 = vsel %vm892, %v1872, 0
        %v1894 = vsel %vm892, %v1873, 0
        %v1897 = vsel %vm892, %v1874, 0
        %v1900 = vsel %vm892, %v1875, 0
        %v1903 = vsel %vm892, %v1876, 0
        %v1906 = vsel %vm892, %v1877, 0
        %v1909 = vsel %vm892, %v1878, 0
        %v1912 = vsel %vm892, %v1879, 0
        %v1915 = vsel %vm892, %v1880, 0
        %1917 = vmatprep.subr.mxu0 %v1866
        %1918 = vmatpush1.msra.mxu0 %v1865
        %1919 = vmatprep.subr.mxu0 %v1868
        %1920 = vmatpush1.msra.mxu0 %v1867
        %1921 = vmatprep.subr.mxu0 0.0
        %1922 = vmatpush1.msra.mxu0 0.0
        %1923 = vmatprep.subr.mxu0 0.0
        %1924 = vmatpush1.msra.mxu0 0.0
        %1925 = vmatprep.subr.mxu0 0.0
        %1926 = vmatpush1.msra.mxu0 0.0
        %1927 = vmatprep.subr.mxu0 0.0
        %1928 = vmatpush1.msra.mxu0 0.0
        %1929 = vmatprep.subr.mxu0 0.0
        %1930 = vmatpush1.msra.mxu0 0.0
        %1931 = vmatprep.subr.mxu0 0.0
        %1932 = vmatpush1.msra.mxu0 0.0
        %1933 = vmatprep.subr.mxu0 0.0
        %1934 = vmatpush1.msra.mxu0 0.0
        %1935 = vmatprep.subr.mxu0 0.0
        %1936 = vmatpush1.msra.mxu0 0.0
        %1937 = vmatprep.subr.mxu0 0.0
        %1938 = vmatpush1.msra.mxu0 0.0
        %1939 = vmatprep.subr.mxu0 0.0
        %1940 = vmatpush1.msra.mxu0 0.0
        %1941 = vmatprep.subr.mxu0 0.0
        %1942 = vmatpush1.msra.mxu0 0.0
        %1943 = vmatprep.subr.mxu0 0.0
        %1944 = vmatpush1.msra.mxu0 0.0
        %1945 = vmatprep.subr.mxu0 0.0
        %1946 = vmatpush1.msra.mxu0 0.0
        %1947 = vmatprep.subr.mxu0 0.0
        %1948 = vmatpush1.msra.mxu0 0.0
        %1949 = vmatprep.subr.mxu0 0.0
        %1950 = vmatpush1.msra.mxu0 0.0
        %1951 = vmatprep.subr.mxu0 0.0
        %1952 = vmatpush1.msra.mxu0 0.0
        %1953 = vmatprep.subr.mxu0 0.0
        %1954 = vmatpush1.msra.mxu0 0.0
        %1955 = vmatprep.subr.mxu0 0.0
        %1956 = vmatpush1.msra.mxu0 0.0
        %1957 = vmatprep.subr.mxu0 0.0
        %1958 = vmatpush1.msra.mxu0 0.0
        %1959 = vmatprep.subr.mxu0 0.0
        %1960 = vmatpush1.msra.mxu0 0.0
        %1961 = vmatprep.subr.mxu0 0.0
        %1962 = vmatpush1.msra.mxu0 0.0
        %1963 = vmatprep.subr.mxu0 0.0
        %1964 = vmatpush1.msra.mxu0 0.0
        %1965 = vmatprep.subr.mxu0 0.0
        %1966 = vmatpush1.msra.mxu0 0.0
        %1967 = vmatprep.subr.mxu0 0.0
        %1968 = vmatpush1.msra.mxu0 0.0
        %1969 = vmatprep.subr.mxu0 0.0
        %1970 = vmatpush1.msra.mxu0 0.0
        %1971 = vmatprep.subr.mxu0 0.0
        %1972 = vmatpush1.msra.mxu0 0.0
        %1973 = vmatprep.subr.mxu0 0.0
        %1974 = vmatpush1.msra.mxu0 0.0
        %1975 = vmatprep.subr.mxu0 0.0
        %1976 = vmatpush1.msra.mxu0 0.0
        %1977 = vmatprep.subr.mxu0 0.0
        %1978 = vmatpush1.msra.mxu0 0.0
        %1979 = vmatprep.subr.mxu0 0.0
        %1980 = vmatpush1.msra.mxu0 0.0
        %1981 = vmatprep.mubr.f32.mxu0 0.0
        %1982 = vmatmul.mubr.f32.gmra.mrb[0].mxu0 %v1882
        %v1983 = vpop.f32.mrb[0].mxu0
        %v1984 = vadd.f32 0.0, %v1983
        %v1985 = vpop.f32.mrb[0].mxu0
        %v1986 = vadd.f32 0.0, %v1985
        %1987 = vmatprep.mubr.f32.mxu0 0.0
        %1988 = vmatmul.mubr.f32.gmra.mrb[0].mxu0 %v1885
        %v1989 = vpop.f32.mrb[0].mxu0
        %v1990 = vadd.f32 0.0, %v1989
        %v1991 = vpop.f32.mrb[0].mxu0
        %v1992 = vadd.f32 0.0, %v1991
        %1993 = vmatprep.mubr.f32.mxu0 0.0
        %1994 = vmatmul.mubr.f32.gmra.mrb[0].mxu0 %v1888
        %v1995 = vpop.f32.mrb[0].mxu0
        %v1996 = vadd.f32 0.0, %v1995
        %v1997 = vpop.f32.mrb[0].mxu0
        %v1998 = vadd.f32 0.0, %v1997
        %1999 = vmatprep.mubr.f32.mxu0 0.0
        %2000 = vmatmul.mubr.f32.gmra.mrb[0].mxu0 %v1891
        %v2001 = vpop.f32.mrb[0].mxu0
        %v2002 = vadd.f32 0.0, %v2001
        %v2003 = vpop.f32.mrb[0].mxu0
        %v2004 = vadd.f32 0.0, %v2003
        %2005 = vmatprep.mubr.f32.mxu0 0.0
        %2006 = vmatmul.mubr.f32.gmra.mrb[0].mxu0 %v1894
        %v2007 = vpop.f32.mrb[0].mxu0
        %v2008 = vadd.f32 0.0, %v2007
        %v2009 = vpop.f32.mrb[0].mxu0
        %v2010 = vadd.f32 0.0, %v2009
        %2011 = vmatprep.mubr.f32.mxu0 0.0
        %2012 = vmatmul.mubr.f32.gmra.mrb[0].mxu0 %v1897
        %v2013 = vpop.f32.mrb[0].mxu0
        %v2014 = vadd.f32 0.0, %v2013
        %v2015 = vpop.f32.mrb[0].mxu0
        %v2016 = vadd.f32 0.0, %v2015
        %2017 = vmatprep.mubr.f32.mxu0 0.0
        %2018 = vmatmul.mubr.f32.gmra.mrb[0].mxu0 %v1900
        %v2019 = vpop.f32.mrb[0].mxu0
        %v2020 = vadd.f32 0.0, %v2019
        %v2021 = vpop.f32.mrb[0].mxu0
        %v2022 = vadd.f32 0.0, %v2021
        %2023 = vmatprep.mubr.f32.mxu0 0.0
        %2024 = vmatmul.mubr.f32.gmra.mrb[0].mxu0 %v1903
        %v2025 = vpop.f32.mrb[0].mxu0
        %v2026 = vadd.f32 0.0, %v2025
        %v2027 = vpop.f32.mrb[0].mxu0
        %v2028 = vadd.f32 0.0, %v2027
        %2029 = vmatprep.mubr.f32.mxu0 0.0
        %2030 = vmatmul.mubr.f32.gmra.mrb[0].mxu0 %v1906
        %v2031 = vpop.f32.mrb[0].mxu0
        %v2032 = vadd.f32 0.0, %v2031
        %v2033 = vpop.f32.mrb[0].mxu0
        %v2034 = vadd.f32 0.0, %v2033
        %2035 = vmatprep.mubr.f32.mxu0 0.0
        %2036 = vmatmul.mubr.f32.gmra.mrb[0].mxu0 %v1909
        %v2037 = vpop.f32.mrb[0].mxu0
        %v2038 = vadd.f32 0.0, %v2037
        %v2039 = vpop.f32.mrb[0].mxu0
        %v2040 = vadd.f32 0.0, %v2039
        %2041 = vmatprep.mubr.f32.mxu0 0.0
        %2042 = vmatmul.mubr.f32.gmra.mrb[0].mxu0 %v1912
        %v2043 = vpop.f32.mrb[0].mxu0
        %v2044 = vadd.f32 0.0, %v2043
        %v2045 = vpop.f32.mrb[0].mxu0
        %v2046 = vadd.f32 0.0, %v2045
        %2047 = vmatprep.mubr.f32.mxu0 0.0
        %2048 = vmatmul.mubr.f32.gmra.mrb[0].mxu0 %v1915
        %v2049 = vpop.f32.mrb[0].mxu0
        %v2050 = vadd.f32 0.0, %v2049
        %v2051 = vpop.f32.mrb[0].mxu0
        %v2052 = vadd.f32 0.0, %v2051
        %2053 = vdwg.mxu0
        %vm2054 = vcmask 654336
        %v2056 = vsel %vm2054, %v1849, 0
        %v2059 = vsel %vm2054, %v1850, 0
        %v2062 = vsel %vm2054, %v1851, 0
        %v2065 = vsel %vm2054, %v1852, 0
        %v2068 = vsel %vm2054, %v1853, 0
        %v2071 = vsel %vm2054, %v1854, 0
        %v2074 = vsel %vm2054, %v1855, 0
        %v2077 = vsel %vm2054, %v1856, 0
        %v2080 = vsel %vm2054, %v1857, 0
        %v2083 = vsel %vm2054, %v1858, 0
        %v2086 = vsel %vm2054, %v1859, 0
        %v2089 = vsel %vm2054, %v1860, 0
        %2091 = vmatprep.subr.mxu0 %v1830
        %2092 = vmatpush1.msra.mxu0 %v1829
        %2093 = vmatprep.subr.mxu0 %v1832
        %2094 = vmatpush1.msra.mxu0 %v1831
        %2095 = vmatprep.subr.mxu0 %v1834
        %2096 = vmatpush1.msra.mxu0 %v1833
        %2097 = vmatprep.subr.mxu0 %v1836
        %2098 = vmatpush1.msra.mxu0 %v1835
        %2099 = vmatprep.subr.mxu0 %v1838
        %2100 = vmatpush1.msra.mxu0 %v1837
        %2101 = vmatprep.subr.mxu0 %v1840
        %2102 = vmatpush1.msra.mxu0 %v1839
        %2103 = vmatprep.subr.mxu0 %v1842
        %2104 = vmatpush1.msra.mxu0 %v1841
        %2105 = vmatprep.subr.mxu0 %v1844
        %2106 = vmatpush1.msra.mxu0 %v1843
        %2107 = vmatprep.subr.mxu0 %v1846
        %2108 = vmatpush1.msra.mxu0 %v1845
        %2109 = vmatprep.subr.mxu0 %v1848
        %2110 = vmatpush1.msra.mxu0 %v1847
        %2111 = vmatprep.subr.mxu0 0.0
        %2112 = vmatpush1.msra.mxu0 0.0
        %2113 = vmatprep.subr.mxu0 0.0
        %2114 = vmatpush1.msra.mxu0 0.0
        %2115 = vmatprep.subr.mxu0 0.0
        %2116 = vmatpush1.msra.mxu0 0.0
        %2117 = vmatprep.subr.mxu0 0.0
        %2118 = vmatpush1.msra.mxu0 0.0
        %2119 = vmatprep.subr.mxu0 0.0
        %2120 = vmatpush1.msra.mxu0 0.0
        %2121 = vmatprep.subr.mxu0 0.0
        %2122 = vmatpush1.msra.mxu0 0.0
        %2123 = vmatprep.subr.mxu0 0.0
        %2124 = vmatpush1.msra.mxu0 0.0
        %2125 = vmatprep.subr.mxu0 0.0
        %2126 = vmatpush1.msra.mxu0 0.0
        %2127 = vmatprep.subr.mxu0 0.0
        %2128 = vmatpush1.msra.mxu0 0.0
        %2129 = vmatprep.subr.mxu0 0.0
        %2130 = vmatpush1.msra.mxu0 0.0
        %2131 = vmatprep.subr.mxu0 0.0
        %2132 = vmatpush1.msra.mxu0 0.0
        %2133 = vmatprep.subr.mxu0 0.0
        %2134 = vmatpush1.msra.mxu0 0.0
        %2135 = vmatprep.subr.mxu0 0.0
        %2136 = vmatpush1.msra.mxu0 0.0
        %2137 = vmatprep.subr.mxu0 0.0
        %2138 = vmatpush1.msra.mxu0 0.0
        %2139 = vmatprep.subr.mxu0 0.0
        %2140 = vmatpush1.msra.mxu0 0.0
        %2141 = vmatprep.subr.mxu0 0.0
        %2142 = vmatpush1.msra.mxu0 0.0
        %2143 = vmatprep.subr.mxu0 0.0
        %2144 = vmatpush1.msra.mxu0 0.0
        %2145 = vmatprep.subr.mxu0 0.0
        %2146 = vmatpush1.msra.mxu0 0.0
        %2147 = vmatprep.subr.mxu0 0.0
        %2148 = vmatpush1.msra.mxu0 0.0
        %2149 = vmatprep.subr.mxu0 0.0
        %2150 = vmatpush1.msra.mxu0 0.0
        %2151 = vmatprep.subr.mxu0 0.0
        %2152 = vmatpush1.msra.mxu0 0.0
        %2153 = vmatprep.subr.mxu0 0.0
        %2154 = vmatpush1.msra.mxu0 0.0
        %2155 = vmatprep.mubr.f32.mxu0 0.0
        %2156 = vmatmul.mubr.f32.gmra.mrb[0].mxu0 %v2056
        %v2157 = vpop.f32.mrb[0].mxu0
        %v2158 = vadd.f32 %v1984, %v2157
        %v2159 = vpop.f32.mrb[0].mxu0
        %v2160 = vadd.f32 %v1986, %v2159
        %2161 = vmatprep.mubr.f32.mxu0 0.0
        %2162 = vmatmul.mubr.f32.gmra.mrb[0].mxu0 %v2059
        %v2163 = vpop.f32.mrb[0].mxu0
        %v2164 = vadd.f32 %v1990, %v2163
        %v2165 = vpop.f32.mrb[0].mxu0
        %v2166 = vadd.f32 %v1992, %v2165
        %2167 = vmatprep.mubr.f32.mxu0 0.0
        %2168 = vmatmul.mubr.f32.gmra.mrb[0].mxu0 %v2062
        %v2169 = vpop.f32.mrb[0].mxu0
        %v2170 = vadd.f32 %v1996, %v2169
        %v2171 = vpop.f32.mrb[0].mxu0
        %v2172 = vadd.f32 %v1998, %v2171
        %2173 = vmatprep.mubr.f32.mxu0 0.0
        %2174 = vmatmul.mubr.f32.gmra.mrb[0].mxu0 %v2065
        %v2175 = vpop.f32.mrb[0].mxu0
        %v2176 = vadd.f32 %v2002, %v2175
        %v2177 = vpop.f32.mrb[0].mxu0
        %v2178 = vadd.f32 %v2004, %v2177
        %2179 = vmatprep.mubr.f32.mxu0 0.0
        %2180 = vmatmul.mubr.f32.gmra.mrb[0].mxu0 %v2068
        %v2181 = vpop.f32.mrb[0].mxu0
        %v2182 = vadd.f32 %v2008, %v2181
        %v2183 = vpop.f32.mrb[0].mxu0
        %v2184 = vadd.f32 %v2010, %v2183
        %2185 = vmatprep.mubr.f32.mxu0 0.0
        %2186 = vmatmul.mubr.f32.gmra.mrb[0].mxu0 %v2071
        %v2187 = vpop.f32.mrb[0].mxu0
        %v2188 = vadd.f32 %v2014, %v2187
        %v2189 = vpop.f32.mrb[0].mxu0
        %v2190 = vadd.f32 %v2016, %v2189
        %2191 = vmatprep.mubr.f32.mxu0 0.0
        %2192 = vmatmul.mubr.f32.gmra.mrb[0].mxu0 %v2074
        %v2193 = vpop.f32.mrb[0].mxu0
        %v2194 = vadd.f32 %v2020, %v2193
        %v2195 = vpop.f32.mrb[0].mxu0
        %v2196 = vadd.f32 %v2022, %v2195
        %2197 = vmatprep.mubr.f32.mxu0 0.0
        %2198 = vmatmul.mubr.f32.gmra.mrb[0].mxu0 %v2077
        %v2199 = vpop.f32.mrb[0].mxu0
        %v2200 = vadd.f32 %v2026, %v2199
        %v2201 = vpop.f32.mrb[0].mxu0
        %v2202 = vadd.f32 %v2028, %v2201
        %2203 = vmatprep.mubr.f32.mxu0 0.0
        %2204 = vmatmul.mubr.f32.gmra.mrb[0].mxu0 %v2080
        %v2205 = vpop.f32.mrb[0].mxu0
        %v2206 = vadd.f32 %v2032, %v2205
        %v2207 = vpop.f32.mrb[0].mxu0
        %v2208 = vadd.f32 %v2034, %v2207
        %2209 = vmatprep.mubr.f32.mxu0 0.0
        %2210 = vmatmul.mubr.f32.gmra.mrb[0].mxu0 %v2083
        %v2211 = vpop.f32.mrb[0].mxu0
        %v2212 = vadd.f32 %v2038, %v2211
        %v2213 = vpop.f32.mrb[0].mxu0
        %v2214 = vadd.f32 %v2040, %v2213
        %2215 = vmatprep.mubr.f32.mxu0 0.0
        %2216 = vmatmul.mubr.f32.gmra.mrb[0].mxu0 %v2086
        %v2217 = vpop.f32.mrb[0].mxu0
        %v2218 = vadd.f32 %v2044, %v2217
        %v2219 = vpop.f32.mrb[0].mxu0
        %v2220 = vadd.f32 %v2046, %v2219
        %2221 = vmatprep.mubr.f32.mxu0 0.0
        %2222 = vmatmul.mubr.f32.gmra.mrb[0].mxu0 %v2089
        %v2223 = vpop.f32.mrb[0].mxu0
        %v2224 = vadd.f32 %v2050, %v2223
        %v2225 = vpop.f32.mrb[0].mxu0
        %v2226 = vadd.f32 %v2052, %v2225
        %2227 = vdwg.mxu0
        %v2228 = vld [vmem:[%s15] sm:$0xff]
        %v2229 = vld [vmem:[%s15 + $0x8] sm:$0xff]
        %v2230 = vld [vmem:[%s15 + $0x10] sm:$0xff]
        %v2231 = vld [vmem:[%s15 + $0x18] sm:$0xff]
        %2233 = vset.pattern.permute.xlu0 0
        %2234 = vperm.xlu0 %2233, %v2228
        %v2235 = vpop.permute.xlu0 %2234
        %2238 = vset.pattern.permute.xlu0 0
        %2239 = vperm.xlu0 %2238, %v2229
        %v2240 = vpop.permute.xlu0 %2239
        %2243 = vset.pattern.permute.xlu0 0
        %2244 = vperm.xlu0 %2243, %v2230
        %v2245 = vpop.permute.xlu0 %2244
        %2248 = vset.pattern.permute.xlu0 0
        %2249 = vperm.xlu0 %2248, %v2231
        %v2250 = vpop.permute.xlu0 %2249
        %v2252 = vadd.f32 %v2235, %v2182
        %v2253 = vadd.f32 %v2235, %v2184
        %v2254 = vadd.f32 %v2240, %v2188
        %v2255 = vadd.f32 %v2240, %v2190
        %v2256 = vadd.f32 %v2245, %v2194
        %v2257 = vadd.f32 %v2245, %v2196
        %v2258 = vadd.f32 %v2250, %v2200
        %v2259 = vadd.f32 %v2250, %v2202
        %2260 = vrot.lane.b32.xlu0 %v2158, 1
        %v2261 = vpop.permute.xlu0 %2260
        %2262 = vrot.lane.b32.xlu0 %v2164, 1
        %v2263 = vpop.permute.xlu0 %2262
        %2264 = vrot.lane.b32.xlu0 %v2170, 1
        %v2265 = vpop.permute.xlu0 %2264
        %2266 = vrot.lane.b32.xlu0 %v2176, 1
        %v2267 = vpop.permute.xlu0 %2266
        %2268 = vrot.lane.b32.xlu0 %v2160, 1
        %v2269 = vpop.permute.xlu0 %2268
        %2270 = vrot.lane.b32.xlu0 %v2166, 1
        %v2271 = vpop.permute.xlu0 %2270
        %2272 = vrot.lane.b32.xlu0 %v2172, 1
        %v2273 = vpop.permute.xlu0 %2272
        %2274 = vrot.lane.b32.xlu0 %v2178, 1
        %v2275 = vpop.permute.xlu0 %2274
        %v2276 = vsel %vm842, %v2261, %v2269
        %v2277 = vsel %vm842, %v2263, %v2271
        %v2278 = vsel %vm842, %v2265, %v2273
        %v2279 = vsel %vm842, %v2267, %v2275
        %v2280 = vsel %vm842, %v2269, %v2261
        %v2281 = vsel %vm842, %v2271, %v2263
        %v2282 = vsel %vm842, %v2273, %v2265
        %v2283 = vsel %vm842, %v2275, %v2267
        %v2284 = vadd.f32 %v2252, %v2280
        %v2285 = vadd.f32 %v2253, %v2276
        %v2286 = vadd.f32 %v2254, %v2281
        %v2287 = vadd.f32 %v2255, %v2277
        %v2288 = vadd.f32 %v2256, %v2282
        %v2289 = vadd.f32 %v2257, %v2278
        %v2290 = vadd.f32 %v2258, %v2283
        %v2291 = vadd.f32 %v2259, %v2279
        %2292 = vrot.lane.b32.xlu0 %v2206, 127
        %v2293 = vpop.permute.xlu0 %2292
        %2294 = vrot.lane.b32.xlu0 %v2212, 127
        %v2295 = vpop.permute.xlu0 %2294
        %2296 = vrot.lane.b32.xlu0 %v2218, 127
        %v2297 = vpop.permute.xlu0 %2296
        %2298 = vrot.lane.b32.xlu0 %v2224, 127
        %v2299 = vpop.permute.xlu0 %2298
        %2300 = vrot.lane.b32.xlu0 %v2208, 127
        %v2301 = vpop.permute.xlu0 %2300
        %2302 = vrot.lane.b32.xlu0 %v2214, 127
        %v2303 = vpop.permute.xlu0 %2302
        %2304 = vrot.lane.b32.xlu0 %v2220, 127
        %v2305 = vpop.permute.xlu0 %2304
        %2306 = vrot.lane.b32.xlu0 %v2226, 127
        %v2307 = vpop.permute.xlu0 %2306
        %v2308 = vsel %vm859, %v2293, %v2301
        %v2309 = vsel %vm859, %v2295, %v2303
        %v2310 = vsel %vm859, %v2297, %v2305
        %v2311 = vsel %vm859, %v2299, %v2307
        %v2312 = vsel %vm859, %v2301, %v2293
        %v2313 = vsel %vm859, %v2303, %v2295
        %v2314 = vsel %vm859, %v2305, %v2297
        %v2315 = vsel %vm859, %v2307, %v2299
        %v2316 = vadd.f32 %v2284, %v2308
        %v2317 = vadd.f32 %v2285, %v2312
        %v2318 = vadd.f32 %v2286, %v2309
        %v2319 = vadd.f32 %v2287, %v2313
        %v2320 = vadd.f32 %v2288, %v2310
        %v2321 = vadd.f32 %v2289, %v2314
        %v2322 = vadd.f32 %v2290, %v2311
        %v2323 = vadd.f32 %v2291, %v2315
        %v2324 = vmul.f32 %v2316, 0.2
        %v2325 = vmul.f32 %v2317, 0.2
        %v2326 = vmul.f32 %v2318, 0.2
        %v2327 = vmul.f32 %v2319, 0.2
        %v2328 = vmul.f32 %v2320, 0.2
        %v2329 = vmul.f32 %v2321, 0.2
        %v2330 = vmul.f32 %v2322, 0.2
        %v2331 = vmul.f32 %v2323, 0.2
        %v2332 = vadd.f32 %v2324, %v676
        %v2333 = vadd.f32 %v2325, %v680
        %v2334 = vadd.f32 %v2326, %v677
        %v2335 = vadd.f32 %v2327, %v681
        %v2336 = vadd.f32 %v2328, %v678
        %v2337 = vadd.f32 %v2329, %v682
        %v2338 = vadd.f32 %v2330, %v679
        %v2339 = vadd.f32 %v2331, %v683
        %2348 = vrot.lane.b32.xlu0 %v2332, 120
        %v2349 = vpop.permute.xlu0 %2348
        %2350 = vrot.lane.b32.xlu0 %v2333, 120
        %v2351 = vpop.permute.xlu0 %2350
        %2352 = vrot.lane.b32.xlu0 %v2334, 120
        %v2353 = vpop.permute.xlu0 %2352
        %2354 = vrot.lane.b32.xlu0 %v2335, 120
        %v2355 = vpop.permute.xlu0 %2354
        %2356 = vrot.lane.b32.xlu0 %v2336, 120
        %v2357 = vpop.permute.xlu0 %2356
        %2358 = vrot.lane.b32.xlu0 %v2337, 120
        %v2359 = vpop.permute.xlu0 %2358
        %2360 = vrot.lane.b32.xlu0 %v2338, 120
        %v2361 = vpop.permute.xlu0 %2360
        %2362 = vrot.lane.b32.xlu0 %v2339, 120
        %v2363 = vpop.permute.xlu0 %2362
        %vm2364 = vcmask 982016
        %v2365 = vsel %vm2364, %v2349, %v2351
        %v2366 = vsel %vm2364, %v2353, %v2355
        %v2367 = vsel %vm2364, %v2357, %v2359
        %v2368 = vsel %vm2364, %v2361, %v2363
        %2373 = vst [vmem:[%s656] sm:$0xff] %v2365
        %2374 = vst [vmem:[%s656 + $0x8] sm:$0xff] %v2366
        %2375 = vst [vmem:[%s656 + $0x10] sm:$0xff] %v2367
        %2376 = vst [vmem:[%s656 + $0x18] sm:$0xff] %v2368
        %s2377 = sand.u32 %s404, 1
        %s2378 = scalar_lea.sflag [#allocation6], %s2377
        %s2379 = sand.u32 %s404, 1
        %s2380 = smul.addr %s2379, 32
        %s2381 = scalar_lea.vmem [#allocation5], %s2380
        // Predicated region
        $region161: #{tpu_custom_call.1} parent=151 // pred_check
          %p2382 = pneg %p414
        $region162: #{tpu_custom_call.1} parent=151 // pred_check_branch
          %2384 = sbr.rel (%p2382) target = $region164
        $region163: #{tpu_custom_call.1} parent=151 // pred_region
          %s2386 = ssub.s32 512, 512
          %2387 = vsyncadd %s2378, %s2386
          %s2388 = smul.addr %s34, 4
          %s2389 = sadd.s32 %s35, %s2388
          %s2390 = smul.addr %s2389, 128
          %s2391 = scalar_lea.hbm %s16, %s2390
          %s2392 = sshll.u32 %s2381, 4
          %s2393 = int_to_ptr.vmem [resolvable:$true] %s2392
          %2398 = dma.vmem_to_hbm [thread:$0]  %s2393, 512, %s2391, %s2378, 128, 128, 8
        $region164: #{tpu_custom_call.1} parent=151 // pred_fallthru
          _
      $region152: #{tpu_custom_call.1} parent=5 // pred_fallthru
        _
      %p2399 = scmp.le.s32.totalorder 2, %s25
      // Predicated region
      $region165: #{tpu_custom_call.1} parent=5 // pred_check
        %p2400 = pneg %p2399
      $region166: #{tpu_custom_call.1} parent=5 // pred_check_branch
        %2402 = sbr.rel (%p2400) target = $region168
      $region167: #{tpu_custom_call.1} parent=5 // pred_region
        %s2403 = ssub.s32 %s25, 2
        // Predicated region
        $region169: #{tpu_custom_call.1} parent=167 // pred_check
          %p2404 = pneg %p420
        $region170: #{tpu_custom_call.1} parent=167 // pred_check_branch
          %2406 = sbr.rel (%p2404) target = $region172
        $region171: #{tpu_custom_call.1} parent=167 // pred_region
          %s2407 = sand.u32 %s405, 1
          %s2408 = scalar_lea.sflag [#allocation6], %s2407
          %s2409 = sand.u32 %s405, 1
          %s2410 = smul.addr %s2409, 32
          %s2411 = scalar_lea.vmem [#allocation5], %s2410
          %2412 = dma.done %s2408, 512
        $region172: #{tpu_custom_call.1} parent=167 // pred_fallthru
          _
      $region168: #{tpu_custom_call.1} parent=5 // pred_fallthru
        _
    $region6: #{tpu_custom_call.1} parent=1 // loop_footer
      %s29 = sadd.s32 1, %s25
    $region7: #{tpu_custom_call.1} parent=1 // loop_footer_branch
      %24 = sbr.rel target = $region3
    $region8: #{tpu_custom_call.1} parent=1 // loop_exit
      _
    %2413 = vsyncpa [#allocation6], 1
    %s2414 = scalar_lea.sflag [#allocation6], 1
    %2415 = vsyncpa %s2414, 1

</llo_original>
